<compile_context>
chip_gen: v7x
topology: tpu7x:2x2x1
jax: 0.10.0
libtpu: 0.0.40
codegen_flags: <defaults>
</compile_context>

<pallas_src>
import functools
import math

import numpy as np

import jax
import jax.numpy as jnp
from jax import lax
from jax.experimental import pallas as pl
from jax.experimental.pallas import tpu as pltpu


_NT = (((1,), (1,)), ((), ()))          # contract last dims:  A @ B^T (MXU absorbs)
_TN = (((0,), (0,)), ((), ()))          # contract first dims: A^T @ B


def _round_up(x, m):
    return (x + m - 1) // m * m


def _vmem_limit_bytes():
    # Generation-aware scoped-VMEM budget: ~0.75x physical, clamped.
    try:
        cap = int(pltpu.get_tpu_info().vmem_capacity_bytes)
        return max(32 * 1024 * 1024, min(96 * 1024 * 1024, cap * 3 // 4))
    except Exception:
        return 48 * 1024 * 1024


_VMEM_LIMIT = _vmem_limit_bytes()


# ----------------------------------------------------------------------------
# Tiled matmul kernel with fused per-output-channel affine (BN/bias) and ReLU.
# ----------------------------------------------------------------------------
def _mm_affine_kernel(x_ref, w_ref, s_ref, b_ref, o_ref, acc_ref, *, relu):
    @pl.when(pl.program_id(2) == 0)
    def _():
        acc_ref[...] = jnp.zeros_like(acc_ref)

    acc_ref[...] += jnp.dot(x_ref[...], w_ref[...],
                            preferred_element_type=jnp.float32)

    @pl.when(pl.program_id(2) == pl.num_programs(2) - 1)
    def _():
        y = acc_ref[...] * s_ref[...] + b_ref[...]
        if relu:
            y = jnp.maximum(y, 0.0)
        o_ref[...] = y.astype(o_ref.dtype)


_TM_CANDIDATES = (1024, 512, 256, 128, 64, 32, 16, 8)


def matmul_affine(x, w, scale, shift, *, relu, out_dtype=jnp.bfloat16):
    """y = act((x @ w) * scale + shift).

    x: (M, Kp); w: (Kp, Np) bf16 with Kp, Np multiples of 128 (packed once at
    prepare_params time); scale/shift: (1, Np) f32.  Returns (M, Np).
    """
    M, K = x.shape
    Kp, Np = w.shape
    assert K == Kp and Kp % 128 == 0 and Np % 128 == 0

    x = x.astype(jnp.bfloat16)                       # bf16 feed, f32 accumulate

    # Pick the largest M tile that divides M (no HBM padding copy); pad only as
    # a last resort (never hit in this network).
    tm = next((c for c in _TM_CANDIDATES if M % c == 0), None)
    if tm is None:
        tm = 256
        Mp = _round_up(M, tm)
        x = jnp.pad(x, ((0, Mp - M), (0, 0)))
    else:
        Mp = M

    tn = 512 if Np % 512 == 0 else (256 if Np % 256 == 0 else 128)
    units = Kp // 128
    tk_units = next((d for d in range(min(units, 8), 0, -1) if units % d == 0), 1)
    tk = tk_units * 128

    out = pl.pallas_call(
        functools.partial(_mm_affine_kernel, relu=relu),
        out_shape=jax.ShapeDtypeStruct((Mp, Np), out_dtype),
        grid_spec=pltpu.PrefetchScalarGridSpec(
            num_scalar_prefetch=0,
            grid=(Mp // tm, Np // tn, Kp // tk),
            in_specs=[
                pl.BlockSpec((tm, tk), lambda i, j, k: (i, k)),
                pl.BlockSpec((tk, tn), lambda i, j, k: (k, j)),
                pl.BlockSpec((1, tn), lambda i, j, k: (0, j)),
                pl.BlockSpec((1, tn), lambda i, j, k: (0, j)),
            ],
            out_specs=pl.BlockSpec((tm, tn), lambda i, j, k: (i, j)),
            scratch_shapes=[pltpu.VMEM((tm, tn), jnp.float32)],
        ),
        compiler_params=pltpu.CompilerParams(
            dimension_semantics=("parallel", "parallel", "arbitrary"),
            vmem_limit_bytes=_VMEM_LIMIT),
    )(x, w, scale, shift)
    if Mp != M:
        out = out[:M]
    return out


# ----------------------------------------------------------------------------
# Fused 3x3 stride-1 conv: no im2col.  The NHWC activation is row-padded and
# flattened to (B, H*W + 2W + 2, C); tap (dy, dx) is then a constant offset
# dy*W + dx into that slab.  Horizontal edge wrap-around (dx=0 at w=0, dx=2 at
# w=W-1) is removed with per-column keep masks.  BN/bias/ReLU fused.
# ----------------------------------------------------------------------------
def _conv3x3_kernel(x_ref, w_ref, kl_ref, kr_ref, s_ref, b_ref, o_ref, acc_ref,
                    *, M, W, relu):
    k = pl.program_id(2)

    @pl.when(k == 0)
    def _():
        acc_ref[...] = jnp.zeros_like(acc_ref)

    acc = acc_ref[...]
    for t in range(9):                                # unrolled 9-tap accumulate
        dy, dx = divmod(t, 3)
        off = dy * W + dx
        lhs = x_ref[0, off:off + M, :]                # (M, tck) bf16
        contrib = jnp.dot(lhs, w_ref[t], preferred_element_type=jnp.float32)
        if dx == 0:
            contrib = contrib * kl_ref[...]           # kill left-edge wrap
        elif dx == 2:
            contrib = contrib * kr_ref[...]           # kill right-edge wrap
        acc = acc + contrib
    acc_ref[...] = acc

    @pl.when(k == pl.num_programs(2) - 1)
    def _():
        y = acc_ref[...] * s_ref[...] + b_ref[...]
        if relu:
            y = jnp.maximum(y, 0.0)
        o_ref[0] = y.astype(o_ref.dtype)


def _conv3x3_plan(H, W, C, Np, out_bytes):
    """Pick (tck, tn) for the fused 3x3 kernel, or None if it won't fit VMEM."""
    M = H * W
    Mpad = M + 2 * W + 2
    tn = 512 if Np % 512 == 0 else (256 if Np % 256 == 0 else 128)
    budget = int(_VMEM_LIMIT * 0.7)
    for tck in (1024, 512, 256, 128):
        if C % tck:
            continue
        need = (2 * Mpad * tck * 2          # double-buffered activation slab
                + 2 * 9 * tck * tn * 2      # double-buffered weight taps
                + 2 * M * tn * out_bytes    # double-buffered output tile
                + M * tn * 4)               # f32 accumulator
        if need <= budget:
            return tck, tn
    return None


def conv3x3_fused(x, cp, *, relu, out_dtype=jnp.bfloat16):
    B, H, W, C = x.shape
    w9 = cp["w9"]                                     # (9, C, Np) bf16
    Np = w9.shape[-1]
    plan = _conv3x3_plan(H, W, C, Np, jnp.dtype(out_dtype).itemsize)
    assert plan is not None
    tck, tn = plan

    M = H * W
    Mpad = M + 2 * W + 2
    # Row-pad by W+1 zero "pixels" on each side of the flattened image; this
    # covers the vertical zero padding, and the horizontal wrap reads are
    # zeroed by the keep masks below.
    xf = jnp.pad(x.astype(jnp.bfloat16).reshape(B, M, C),
                 ((0, 0), (W + 1, W + 1), (0, 0)))

    col = np.arange(M, dtype=np.int32) % W
    keep_l = jnp.asarray((col != 0).astype(np.float32).reshape(M, 1))
    keep_r = jnp.asarray((col != W - 1).astype(np.float32).reshape(M, 1))

    out = pl.pallas_call(
        functools.partial(_conv3x3_kernel, M=M, W=W, relu=relu),
        out_shape=jax.ShapeDtypeStruct((B, M, Np), out_dtype),
        grid_spec=pltpu.PrefetchScalarGridSpec(
            num_scalar_prefetch=0,
            grid=(B, Np // tn, C // tck),
            in_specs=[
                pl.BlockSpec((1, Mpad, tck), lambda b, j, k: (b, 0, k)),
                pl.BlockSpec((9, tck, tn), lambda b, j, k: (0, k, j)),
                pl.BlockSpec((M, 1), lambda b, j, k: (0, 0)),
                pl.BlockSpec((M, 1), lambda b, j, k: (0, 0)),
                pl.BlockSpec((1, tn), lambda b, j, k: (0, j)),
                pl.BlockSpec((1, tn), lambda b, j, k: (0, j)),
            ],
            out_specs=pl.BlockSpec((1, M, tn), lambda b, j, k: (b, 0, j)),
            scratch_shapes=[pltpu.VMEM((M, tn), jnp.float32)],
        ),
        compiler_params=pltpu.CompilerParams(
            dimension_semantics=("parallel", "parallel", "arbitrary"),
            vmem_limit_bytes=_VMEM_LIMIT),
    )(xf, w9, keep_l, keep_r, cp["scale"], cp["shift"])
    return out.reshape(B, H, W, Np)


# ----------------------------------------------------------------------------
# Conv2d dispatcher: 1x1 -> plain GEMM, 3x3 stride-1 -> fused kernel,
# otherwise (strided stem convs) -> im2col GEMM fallback.
# ----------------------------------------------------------------------------
def _im2col_nhwc(x, k, stride, pad):
    B, H, W, C = x.shape
    xp = jnp.pad(x, ((0, 0), (pad, pad), (pad, pad), (0, 0)))
    Ho = (H + 2 * pad - k) // stride + 1
    Wo = (W + 2 * pad - k) // stride + 1
    cols = []
    for i in range(k):
        for j in range(k):
            cols.append(xp[:, i:i + stride * Ho:stride,
                           j:j + stride * Wo:stride, :])
    cols = jnp.concatenate(cols, axis=-1)            # (B, Ho, Wo, k*k*C)
    return cols.reshape(B * Ho * Wo, k * k * C), Ho, Wo


def conv_gemm(x, cp, *, ksize=1, stride=1, relu=False, out_dtype=jnp.bfloat16):
    B, H, W, C = x.shape
    if ksize == 1:
        y = matmul_affine(x.reshape(B * H * W, C), cp["w"], cp["scale"],
                          cp["shift"], relu=relu, out_dtype=out_dtype)
        return y.reshape(B, H, W, -1)
    if (stride == 1 and "w9" in cp
            and _conv3x3_plan(H, W, C, cp["w9"].shape[-1],
                              jnp.dtype(out_dtype).itemsize) is not None):
        return conv3x3_fused(x, cp, relu=relu, out_dtype=out_dtype)
    # TODO(synk): strided 3x3 convs still go through an im2col GEMM.
    cols, Ho, Wo = _im2col_nhwc(x, ksize, stride, ksize // 2)
    Kp = cp["w"].shape[0]
    if cols.shape[1] < Kp:                            # only the Cin=3 stem conv
        cols = jnp.pad(cols, ((0, 0), (0, Kp - cols.shape[1])))
    y = matmul_affine(cols, cp["w"], cp["scale"], cp["shift"],
                      relu=relu, out_dtype=out_dtype)
    return y.reshape(B, Ho, Wo, -1)


# ----------------------------------------------------------------------------
# PAM: flash-style tiled position attention (online softmax, no transposes).
# ----------------------------------------------------------------------------
def _pam_flash_kernel(q_ref, k_ref, v_ref, x_ref, g_ref, o_ref,
                      m_sc, l_sc, acc_sc):
    kv = pl.program_id(2)

    @pl.when(kv == 0)
    def _():
        m_sc[...] = jnp.full(m_sc.shape, -jnp.inf, dtype=jnp.float32)
        l_sc[...] = jnp.zeros_like(l_sc)
        acc_sc[...] = jnp.zeros_like(acc_sc)

    q = q_ref[0]                                     # (tq, Cq)  bf16
    k = k_ref[0]                                     # (tk, Cq)  bf16
    v = v_ref[0]                                     # (tk, C)   bf16
    s = lax.dot_general(q, k, _NT, preferred_element_type=jnp.float32)  # (tq,tk)
    m_prev = m_sc[...]
    m_new = jnp.maximum(m_prev, jnp.max(s, axis=-1, keepdims=True))
    alpha = jnp.exp(m_prev - m_new)
    # bf16 exp hits the bf16 EUP path on v6e/v7x; row sums accumulate in f32.
    p = jnp.exp((s - m_new).astype(jnp.bfloat16))
    l_sc[...] = alpha * l_sc[...] + jnp.sum(p, axis=-1, keepdims=True,
                                            dtype=jnp.float32)
    acc_sc[...] = alpha * acc_sc[...] + jnp.dot(
        p.astype(v.dtype), v, preferred_element_type=jnp.float32)
    m_sc[...] = m_new

    @pl.when(kv == pl.num_programs(2) - 1)
    def _():
        gamma = g_ref[0]
        out = acc_sc[...] * pl.reciprocal(l_sc[...], approx=True)
        o_ref[0] = (gamma * out + x_ref[0].astype(jnp.float32)).astype(o_ref.dtype)


def _attn_tile(n, cap=512):
    for t in (cap, 256, 128, 64, 32, 16, 8):
        if t <= n and n % t == 0:
            return t
    return n                                          # full-extent fallback


def pam_module(feat, gp):
    B, H, W, C = feat.shape
    N = H * W
    # 1x1 projections; q/k channel dim is zero-padded 64 -> 128 at prep time so
    # QK^T uses full 128-lane vregs (padding contributes exactly 0).
    q = conv_gemm(feat, gp["pam_q"], ksize=1).reshape(B, N, -1)
    kk = conv_gemm(feat, gp["pam_k"], ksize=1).reshape(B, N, -1)
    v = conv_gemm(feat, gp["pam_v"], ksize=1).reshape(B, N, C)
    x_flat = feat.reshape(B, N, C)
    Cq = q.shape[-1]
    tq = _attn_tile(N)
    tk = _attn_tile(N)
    out = pl.pallas_call(
        _pam_flash_kernel,
        out_shape=jax.ShapeDtypeStruct((B, N, C), feat.dtype),
        grid=(B, N // tq, N // tk),
        in_specs=[
            pl.BlockSpec((1, tq, Cq), lambda b, i, j: (b, i, 0)),
            pl.BlockSpec((1, tk, Cq), lambda b, i, j: (b, j, 0)),
            pl.BlockSpec((1, tk, C), lambda b, i, j: (b, j, 0)),
            pl.BlockSpec((1, tq, C), lambda b, i, j: (b, i, 0)),
            pl.BlockSpec(memory_space=pltpu.MemorySpace.SMEM),
        ],
        out_specs=pl.BlockSpec((1, tq, C), lambda b, i, j: (b, i, 0)),
        scratch_shapes=[
            pltpu.VMEM((tq, 1), jnp.float32),
            pltpu.VMEM((tq, 1), jnp.float32),
            pltpu.VMEM((tq, C), jnp.float32),
        ],
        compiler_params=pltpu.CompilerParams(
            dimension_semantics=("parallel", "parallel", "arbitrary"),
            vmem_limit_bytes=_VMEM_LIMIT),
    )(q, kk, v, x_flat, gp["pam_gamma"])
    return out.reshape(B, H, W, C)


# ----------------------------------------------------------------------------
# CAM: channel attention, tiled over N (VMEM-safe on v7x).
# Pass 1 accumulates energy = X^T X over N-tiles and emits attn (C, C);
# Pass 2 applies out = gamma * X @ attn^T + X per N-tile.
# ----------------------------------------------------------------------------
def _cam_energy_kernel(x_ref, attn_ref, e_sc):
    i = pl.program_id(1)

    @pl.when(i == 0)
    def _():
        e_sc[...] = jnp.zeros_like(e_sc)

    x = x_ref[0]                                     # (tn, C) bf16
    e_sc[...] += lax.dot_general(x, x, _TN, preferred_element_type=jnp.float32)

    @pl.when(i == pl.num_programs(1) - 1)
    def _():
        energy = e_sc[...]
        # DANet 'energy_new' quirk: rowmax - energy, then another rowmax shift
        # for numerics (net shift by the row minimum).  Keep both steps.
        energy = jnp.max(energy, axis=-1, keepdims=True) - energy
        energy = energy - jnp.max(energy, axis=-1, keepdims=True)
        p = jnp.exp(energy)
        attn = p * pl.reciprocal(jnp.sum(p, axis=-1, keepdims=True), approx=True)
        attn_ref[0] = attn.astype(attn_ref.dtype)


def _cam_apply_kernel(x_ref, attn_ref, g_ref, o_ref):
    x = x_ref[0]                                     # (tn, C) bf16
    attn = attn_ref[0]                               # (C, C)  bf16
    out = lax.dot_general(x, attn, _NT, preferred_element_type=jnp.float32)
    o_ref[0] = (g_ref[0] * out + x.astype(jnp.float32)).astype(o_ref.dtype)


def cam_module(feat, gp):
    B, H, W, C = feat.shape
    N = H * W
    x_flat = feat.reshape(B, N, C)
    tn = _attn_tile(N)
    attn = pl.pallas_call(
        _cam_energy_kernel,
        out_shape=jax.ShapeDtypeStruct((B, C, C), jnp.bfloat16),
        grid=(B, N // tn),
        in_specs=[pl.BlockSpec((1, tn, C), lambda b, i: (b, i, 0))],
        out_specs=pl.BlockSpec((1, C, C), lambda b, i: (b, 0, 0)),
        scratch_shapes=[pltpu.VMEM((C, C), jnp.float32)],
        compiler_params=pltpu.CompilerParams(
            dimension_semantics=("parallel", "arbitrary"),
            vmem_limit_bytes=_VMEM_LIMIT),
    )(x_flat)
    out = pl.pallas_call(
        _cam_apply_kernel,
        out_shape=jax.ShapeDtypeStruct((B, N, C), feat.dtype),
        grid=(B, N // tn),
        in_specs=[
            pl.BlockSpec((1, tn, C), lambda b, i: (b, i, 0)),
            pl.BlockSpec((1, C, C), lambda b, i: (b, 0, 0)),
            pl.BlockSpec(memory_space=pltpu.MemorySpace.SMEM),
        ],
        out_specs=pl.BlockSpec((1, tn, C), lambda b, i: (b, i, 0)),
        compiler_params=pltpu.CompilerParams(
            dimension_semantics=("parallel", "parallel"),
            vmem_limit_bytes=_VMEM_LIMIT),
    )(x_flat, attn, gp["cam_gamma"])
    return out.reshape(B, H, W, C)


# ----------------------------------------------------------------------------
# Bilinear resize (align_corners=True), NHWC, as two small interpolation-matrix
# einsums (no gathers) — XLA glue, not a Pallas kernel.
# ----------------------------------------------------------------------------
def _interp_matrix(out_size, in_size):
    m = np.zeros((out_size, in_size), np.float64)
    if out_size == 1:
        m[:, 0] = 1.0
        return jnp.asarray(m.astype(np.float32))
    pos = np.arange(out_size, dtype=np.float64) * (in_size - 1) / (out_size - 1)
    lo = np.floor(pos).astype(np.int64)
    hi = np.minimum(lo + 1, in_size - 1)
    w = pos - lo
    m[np.arange(out_size), lo] += 1.0 - w
    m[np.arange(out_size), hi] += w
    return jnp.asarray(m.astype(np.float32))


def bilinear_resize_nhwc(x, out_h, out_w):
    B, H, W, C = x.shape
    if (H, W) == (out_h, out_w):
        return x
    ry = _interp_matrix(out_h, H)
    rx = _interp_matrix(out_w, W)
    y = jnp.einsum('oh,bhwc->bowc', ry, x.astype(jnp.float32))
    y = jnp.einsum('pw,bowc->bopc', rx, y)
    return y.astype(x.dtype)


# ----------------------------------------------------------------------------
# DA head (DABlock_ours) and FPN decoder (FPNDecoder).
# ----------------------------------------------------------------------------
def da_block(gp, x):
    feat1 = conv_gemm(x, gp["conv5a"], ksize=3, relu=True)    # 2048 -> 512
    sa_feat = pam_module(feat1, gp)
    sa_conv = conv_gemm(sa_feat, gp["conv51"], ksize=3, relu=True)
    sa_out = conv_gemm(sa_conv, gp["conv6"], ksize=1)

    feat2 = conv_gemm(x, gp["conv5c"], ksize=3, relu=True)
    sc_feat = cam_module(feat2, gp)
    sc_conv = conv_gemm(sc_feat, gp["conv52"], ksize=3, relu=True)
    sc_out = conv_gemm(sc_conv, gp["conv7"], ksize=1)
    return sa_out + sc_out


def fpn_decoder(gp, conv_out, num_classes):
    f = conv_gemm(conv_out[3], gp["fpn_in"][3], ksize=1, relu=True)
    feats = [f]
    for i in reversed(range(3)):
        conv_x = conv_gemm(conv_out[i], gp["fpn_in"][i], ksize=1, relu=True)
        f = bilinear_resize_nhwc(f, conv_x.shape[1], conv_x.shape[2])
        f = conv_x + f
        feats.append(conv_gemm(f, gp["fpn_out"][i], ksize=3, relu=True))
    feats.reverse()
    oh, ow = feats[0].shape[1], feats[0].shape[2]
    fusion = jnp.concatenate(
        [feats[0]] + [bilinear_resize_nhwc(t, oh, ow) for t in feats[1:]],
        axis=-1)                                              # 4*128 = 512 ch
    y = conv_gemm(fusion, gp["conv_last0"], ksize=3, relu=True)
    y = conv_gemm(y, gp["conv_last1"], ksize=1, out_dtype=jnp.float32)
    return y[..., :num_classes]


def danet_forward(gp, x, *, num_classes):
    # NCHW -> NHWC only at the model boundary; bf16 activations in between.
    x = jnp.transpose(x, (0, 2, 3, 1))
    x0 = conv_gemm(x, gp["layer0a"], ksize=3, stride=2, relu=True)
    x0 = conv_gemm(x0, gp["layer0b"], ksize=3, stride=2, relu=True)
    x1 = conv_gemm(x0, gp["layer1"], ksize=3, relu=True)
    x2 = conv_gemm(x1, gp["layer2"], ksize=3, stride=2, relu=True)
    x3 = conv_gemm(x2, gp["layer3"], ksize=3, relu=True)      # 'D': stride 1
    x4 = conv_gemm(x3, gp["layer4"], ksize=3, relu=True)      # 'D': stride 1
    da_out = da_block(gp, x4)                                 # 512 channels
    out = fpn_decoder(gp, [x1, x2, x3, da_out], num_classes)
    out = bilinear_resize_nhwc(out, x.shape[1], x.shape[2])
    return jnp.transpose(out, (0, 3, 1, 2))


# ----------------------------------------------------------------------------
# Deterministic parameter init (PyTorch layout) + one-time GEMM packing.
# ----------------------------------------------------------------------------
def init_params(key, num_classes):
    keys = iter(jax.random.split(key, 64))

    def conv_w(cout, cin, k):
        fan = cin * k * k
        return jax.random.normal(next(keys), (cout, cin, k, k),
                                 jnp.float32) * math.sqrt(2.0 / fan)

    def bn(c):
        return dict(w=jnp.ones((c,), jnp.float32), b=jnp.zeros((c,), jnp.float32),
                    mean=jnp.zeros((c,), jnp.float32), var=jnp.ones((c,), jnp.float32))

    def cbr(cout, cin, k=3):
        return dict(w=conv_w(cout, cin, k), bn=bn(cout))

    p = {}
    # backbone stand-in
    p["layer0a"] = cbr(64, 3)
    p["layer0b"] = cbr(64, 64)
    p["layer1"] = cbr(256, 64)
    p["layer2"] = cbr(512, 256)
    p["layer3"] = cbr(1024, 512)
    p["layer4"] = cbr(2048, 1024)
    # DA head: DABlock_ours(out_planes=512, in_planes=2048), inner_planes=512
    p["conv5a"] = cbr(512, 2048)
    p["conv5c"] = cbr(512, 2048)
    p["pam_q"] = dict(w=conv_w(64, 512, 1), b=jnp.zeros((64,), jnp.float32))
    p["pam_k"] = dict(w=conv_w(64, 512, 1), b=jnp.zeros((64,), jnp.float32))
    p["pam_v"] = dict(w=conv_w(512, 512, 1), b=jnp.zeros((512,), jnp.float32))
    p["pam_gamma"] = jnp.full((1,), 0.5, jnp.float32)
    p["cam_gamma"] = jnp.full((1,), 0.5, jnp.float32)
    p["conv51"] = cbr(512, 512)
    p["conv52"] = cbr(512, 512)
    p["conv6"] = dict(w=conv_w(512, 512, 1), b=jnp.zeros((512,), jnp.float32))
    p["conv7"] = dict(w=conv_w(512, 512, 1), b=jnp.zeros((512,), jnp.float32))
    # FPN decoder: fpn_inplanes=[256, 512, 1024, 512], fpn_dim=128
    p["fpn_in"] = [dict(w=conv_w(128, c, 1), b=jnp.zeros((128,), jnp.float32),
                        bn=bn(128)) for c in (256, 512, 1024, 512)]
    p["fpn_out"] = [cbr(128, 128) for _ in range(3)]
    p["conv_last0"] = cbr(128, 4 * 128)
    p["conv_last1"] = dict(w=conv_w(num_classes, 128, 1),
                           b=jnp.zeros((num_classes,), jnp.float32))
    return p


def _prep_conv(layer, cin_in):
    """Pack one conv into GEMM-ready form: bf16 (Kp, Np) weight + f32 affine.

    For 3x3 convs with lane-padded input channels, also keep the per-tap view
    (9, cin_in, Np) used by the fused conv kernel.
    """
    w = layer["w"]
    Cout, Cin, kh, kw = w.shape
    if "bn" in layer:
        bnp = layer["bn"]
        s = bnp["w"] / jnp.sqrt(bnp["var"] + 1e-5)
        sh = bnp["b"] - bnp["mean"] * s
    else:
        s = jnp.ones((Cout,), jnp.float32)
        sh = jnp.zeros((Cout,), jnp.float32)
    if "b" in layer:
        sh = sh + layer["b"] * s
    # pad Cin to the (lane-padded) incoming activation channel count, then
    # repack (Cout,Cin,kh,kw) -> (kh*kw*Cin, Cout) to match NHWC im2col order.
    w = jnp.pad(w, ((0, 0), (0, cin_in - Cin), (0, 0), (0, 0)))
    wm = w.transpose(2, 3, 1, 0).reshape(kh * kw * cin_in, Cout)
    K = kh * kw * cin_in
    Kp = _round_up(K, 128)
    Np = _round_up(Cout, 128)
    wm = jnp.pad(wm, ((0, Kp - K), (0, Np - Cout))).astype(jnp.bfloat16)
    s = jnp.pad(s, (0, Np - Cout)).reshape(1, Np)
    sh = jnp.pad(sh, (0, Np - Cout)).reshape(1, Np)
    out = dict(w=wm, scale=s, shift=sh)
    if kh == 3 and kw == 3 and cin_in % 128 == 0:     # Kp == 9*cin_in exactly
        out["w9"] = wm.reshape(9, cin_in, Np)
    return out


def prepare_params(p):
    g = {}
    g["layer0a"] = _prep_conv(p["layer0a"], 3)
    g["layer0b"] = _prep_conv(p["layer0b"], 128)      # activation padded 64->128
    g["layer1"] = _prep_conv(p["layer1"], 128)
    g["layer2"] = _prep_conv(p["layer2"], 256)
    g["layer3"] = _prep_conv(p["layer3"], 512)
    g["layer4"] = _prep_conv(p["layer4"], 1024)
    g["conv5a"] = _prep_conv(p["conv5a"], 2048)
    g["conv5c"] = _prep_conv(p["conv5c"], 2048)
    g["pam_q"] = _prep_conv(p["pam_q"], 512)          # Cq 64 -> 128 lane pad
    g["pam_k"] = _prep_conv(p["pam_k"], 512)
    g["pam_v"] = _prep_conv(p["pam_v"], 512)
    g["conv51"] = _prep_conv(p["conv51"], 512)
    g["conv52"] = _prep_conv(p["conv52"], 512)
    g["conv6"] = _prep_conv(p["conv6"], 512)
    g["conv7"] = _prep_conv(p["conv7"], 512)
    g["fpn_in"] = [_prep_conv(p["fpn_in"][i], c)
                   for i, c in enumerate((256, 512, 1024, 512))]
    g["fpn_out"] = [_prep_conv(p["fpn_out"][i], 128) for i in range(3)]
    g["conv_last0"] = _prep_conv(p["conv_last0"], 512)
    g["conv_last1"] = _prep_conv(p["conv_last1"], 128)
    g["pam_gamma"] = p["pam_gamma"]
    g["cam_gamma"] = p["cam_gamma"]
    return g


def _selfcheck_conv3x3(key):
    """Fused 3x3 kernel vs the im2col GEMM reference on a tiny problem."""
    kx, kw = jax.random.split(key)
    x = jax.random.normal(kx, (1, 4, 4, 128), jnp.float32).astype(jnp.bfloat16)
    layer = dict(w=jax.random.normal(kw, (128, 128, 3, 3), jnp.float32) * 0.05,
                 bn=dict(w=jnp.ones((128,), jnp.float32),
                         b=jnp.zeros((128,), jnp.float32),
                         mean=jnp.zeros((128,), jnp.float32),
                         var=jnp.ones((128,), jnp.float32)))
    cp = _prep_conv(layer, 128)
    fused = conv3x3_fused(x, cp, relu=False, out_dtype=jnp.float32)
    cols, Ho, Wo = _im2col_nhwc(x, 3, 1, 1)
    ref = matmul_affine(cols, cp["w"], cp["scale"], cp["shift"],
                        relu=False, out_dtype=jnp.float32).reshape(1, Ho, Wo, -1)
    err = float(jnp.max(jnp.abs(fused - ref)))
    assert err < 0.1, f"conv3x3 self-check failed: max abs err {err}"


if __name__ == "__main__":
    num_classes = 19
    key = jax.random.PRNGKey(0)
    pkey, xkey, ckey = jax.random.split(key, 3)

    _selfcheck_conv3x3(ckey)                  # fused conv == im2col reference

    params = init_params(pkey, num_classes)
    gparams = prepare_params(params)          # one-time GEMM-ready bf16 packing
    x = jax.random.normal(xkey, (2, 3, 32, 32), jnp.float32)

    fwd = jax.jit(functools.partial(danet_forward, num_classes=num_classes))
    out = jax.block_until_ready(fwd(gparams, x))

    assert out.shape == (2, num_classes, 32, 32), out.shape
    assert bool(jnp.all(jnp.isfinite(out)))
    print("KERNEL_OK")
</pallas_src>

<mosaic_0001>
module attributes {stable_mosaic.version = 11 : i64} {
  func.func @_conv3x3_kernel(%arg0: i32, %arg1: i32, %arg2: i32, %arg3: memref<1x26x128xbf16, #tpu.memory_space<vmem>>, %arg4: memref<9x128x128xbf16, #tpu.memory_space<vmem>>, %arg5: memref<16x1xf32, #tpu.memory_space<vmem>>, %arg6: memref<16x1xf32, #tpu.memory_space<vmem>>, %arg7: memref<1x128xf32, #tpu.memory_space<vmem>>, %arg8: memref<1x128xf32, #tpu.memory_space<vmem>>, %arg9: memref<1x16x128xf32, #tpu.memory_space<vmem>>, %arg10: memref<16x128xf32, #tpu.memory_space<vmem>>) attributes {dimension_semantics = [#tpu.dimension_semantics<parallel>, #tpu.dimension_semantics<parallel>, #tpu.dimension_semantics<arbitrary>], iteration_bounds = array<i64: 1, 1, 1>, scalar_prefetch = 0 : i64, scratch_operands = 1 : i64, tpu.core_type = #tpu.core_type<tc>, window_params = [{transform_indices = @transform_0, window_bounds = array<i64: 1, 26, 128>}, {transform_indices = @transform_1, window_bounds = array<i64: 9, 128, 128>}, {pipeline_mode = #tpu.pipeline_mode<synchronous>, transform_indices = @transform_2, window_bounds = array<i64: 16, 1>}, {pipeline_mode = #tpu.pipeline_mode<synchronous>, transform_indices = @transform_3, window_bounds = array<i64: 16, 1>}, {transform_indices = @transform_4, window_bounds = array<i64: 1, 128>}, {transform_indices = @transform_5, window_bounds = array<i64: 1, 128>}, {transform_indices = @transform_6, window_bounds = array<i64: 1, 16, 128>}]} {
    %c0_i32 = arith.constant 0 : i32
    %0 = arith.cmpi eq, %arg2, %c0_i32 : i32
    %1 = arith.extui %0 : i1 to i32
    %c0_i32_0 = arith.constant 0 : i32
    %2 = arith.cmpi ne, %1, %c0_i32_0 : i32
    scf.if %2 {
      %cst_70 = arith.constant 0.000000e+00 : f32
      %80 = vector.broadcast %cst_70 : f32 to vector<16x128xf32>
      %c0_71 = arith.constant 0 : index
      %c0_72 = arith.constant 0 : index
      %81 = vector.load %arg10[%c0_71, %c0_72] : memref<16x128xf32, #tpu.memory_space<vmem>>, vector<16x128xf32>
      tpu.vector_store %arg10[%c0_71, %c0_72], %80 {strides = array<i32>} : memref<16x128xf32, #tpu.memory_space<vmem>>, vector<16x128xf32>,
    } else {
    }
    %c0 = arith.constant 0 : index
    %c0_1 = arith.constant 0 : index
    %3 = vector.load %arg10[%c0, %c0_1] : memref<16x128xf32, #tpu.memory_space<vmem>>, vector<16x128xf32>
    %c0_2 = arith.constant 0 : index
    %c0_3 = arith.constant 0 : index
    %c0_4 = arith.constant 0 : index
    %4 = vector.load %arg3[%c0_2, %c0_3, %c0_4] : memref<1x26x128xbf16, #tpu.memory_space<vmem>>, vector<1x16x128xbf16>
    %5 = vector.shape_cast %4 : vector<1x16x128xbf16> to vector<16x128xbf16>
    %c0_5 = arith.constant 0 : index
    %c0_6 = arith.constant 0 : index
    %c0_7 = arith.constant 0 : index
    %6 = vector.load %arg4[%c0_5, %c0_6, %c0_7] : memref<9x128x128xbf16, #tpu.memory_space<vmem>>, vector<1x128x128xbf16>
    %7 = vector.shape_cast %6 : vector<1x128x128xbf16> to vector<128x128xbf16>
    %cst = arith.constant dense<0.000000e+00> : vector<16x128xf32>
    %8 = tpu.matmul %5, %7, %cst {dimension_numbers = #tpu.dot_dimension_numbers<[1], [0], [0], [1], [0, 0, 1, 1], [], []>} : vector<16x128xbf16>, vector<128x128xbf16>, vector<16x128xf32> -> vector<16x128xf32>
    %c0_8 = arith.constant 0 : index
    %c0_9 = arith.constant 0 : index
    %9 = vector.load %arg5[%c0_8, %c0_9] : memref<16x1xf32, #tpu.memory_space<vmem>>, vector<16x1xf32>
    %10 = vector.broadcast %9 : vector<16x1xf32> to vector<16x128xf32>
    %11 = arith.mulf %8, %10 : vector<16x128xf32>
    %12 = arith.addf %3, %11 : vector<16x128xf32>
    %c0_10 = arith.constant 0 : index
    %c1 = arith.constant 1 : index
    %c0_11 = arith.constant 0 : index
    %13 = vector.load %arg3[%c0_10, %c1, %c0_11] : memref<1x26x128xbf16, #tpu.memory_space<vmem>>, vector<1x16x128xbf16>
    %14 = vector.shape_cast %13 : vector<1x16x128xbf16> to vector<16x128xbf16>
    %c1_12 = arith.constant 1 : index
    %c0_13 = arith.constant 0 : index
    %c0_14 = arith.constant 0 : index
    %15 = vector.load %arg4[%c1_12, %c0_13, %c0_14] : memref<9x128x128xbf16, #tpu.memory_space<vmem>>, vector<1x128x128xbf16>
    %16 = vector.shape_cast %15 : vector<1x128x128xbf16> to vector<128x128xbf16>
    %cst_15 = arith.constant dense<0.000000e+00> : vector<16x128xf32>
    %17 = tpu.matmul %14, %16, %cst_15 {dimension_numbers = #tpu.dot_dimension_numbers<[1], [0], [0], [1], [0, 0, 1, 1], [], []>} : vector<16x128xbf16>, vector<128x128xbf16>, vector<16x128xf32> -> vector<16x128xf32>
    %18 = arith.addf %12, %17 : vector<16x128xf32>
    %c0_16 = arith.constant 0 : index
    %c2 = arith.constant 2 : index
    %c0_17 = arith.constant 0 : index
    %19 = vector.load %arg3[%c0_16, %c2, %c0_17] : memref<1x26x128xbf16, #tpu.memory_space<vmem>>, vector<1x16x128xbf16>
    %20 = vector.shape_cast %19 : vector<1x16x128xbf16> to vector<16x128xbf16>
    %c2_18 = arith.constant 2 : index
    %c0_19 = arith.constant 0 : index
    %c0_20 = arith.constant 0 : index
    %21 = vector.load %arg4[%c2_18, %c0_19, %c0_20] : memref<9x128x128xbf16, #tpu.memory_space<vmem>>, vector<1x128x128xbf16>
    %22 = vector.shape_cast %21 : vector<1x128x128xbf16> to vector<128x128xbf16>
    %cst_21 = arith.constant dense<0.000000e+00> : vector<16x128xf32>
    %23 = tpu.matmul %20, %22, %cst_21 {dimension_numbers = #tpu.dot_dimension_numbers<[1], [0], [0], [1], [0, 0, 1, 1], [], []>} : vector<16x128xbf16>, vector<128x128xbf16>, vector<16x128xf32> -> vector<16x128xf32>
    %c0_22 = arith.constant 0 : index
    %c0_23 = arith.constant 0 : index
    %24 = vector.load %arg6[%c0_22, %c0_23] : memref<16x1xf32, #tpu.memory_space<vmem>>, vector<16x1xf32>
    %25 = vector.broadcast %24 : vector<16x1xf32> to vector<16x128xf32>
    %26 = arith.mulf %23, %25 : vector<16x128xf32>
    %27 = arith.addf %18, %26 : vector<16x128xf32>
    %c0_24 = arith.constant 0 : index
    %c4 = arith.constant 4 : index
    %c0_25 = arith.constant 0 : index
    %28 = vector.load %arg3[%c0_24, %c4, %c0_25] : memref<1x26x128xbf16, #tpu.memory_space<vmem>>, vector<1x16x128xbf16>
    %29 = vector.shape_cast %28 : vector<1x16x128xbf16> to vector<16x128xbf16>
    %c3 = arith.constant 3 : index
    %c0_26 = arith.constant 0 : index
    %c0_27 = arith.constant 0 : index
    %30 = vector.load %arg4[%c3, %c0_26, %c0_27] : memref<9x128x128xbf16, #tpu.memory_space<vmem>>, vector<1x128x128xbf16>
    %31 = vector.shape_cast %30 : vector<1x128x128xbf16> to vector<128x128xbf16>
    %cst_28 = arith.constant dense<0.000000e+00> : vector<16x128xf32>
    %32 = tpu.matmul %29, %31, %cst_28 {dimension_numbers = #tpu.dot_dimension_numbers<[1], [0], [0], [1], [0, 0, 1, 1], [], []>} : vector<16x128xbf16>, vector<128x128xbf16>, vector<16x128xf32> -> vector<16x128xf32>
    %c0_29 = arith.constant 0 : index
    %c0_30 = arith.constant 0 : index
    %33 = vector.load %arg5[%c0_29, %c0_30] : memref<16x1xf32, #tpu.memory_space<vmem>>, vector<16x1xf32>
    %34 = vector.broadcast %33 : vector<16x1xf32> to vector<16x128xf32>
    %35 = arith.mulf %32, %34 : vector<16x128xf32>
    %36 = arith.addf %27, %35 : vector<16x128xf32>
    %c0_31 = arith.constant 0 : index
    %c5 = arith.constant 5 : index
    %c0_32 = arith.constant 0 : index
    %37 = vector.load %arg3[%c0_31, %c5, %c0_32] : memref<1x26x128xbf16, #tpu.memory_space<vmem>>, vector<1x16x128xbf16>
    %38 = vector.shape_cast %37 : vector<1x16x128xbf16> to vector<16x128xbf16>
    %c4_33 = arith.constant 4 : index
    %c0_34 = arith.constant 0 : index
    %c0_35 = arith.constant 0 : index
    %39 = vector.load %arg4[%c4_33, %c0_34, %c0_35] : memref<9x128x128xbf16, #tpu.memory_space<vmem>>, vector<1x128x128xbf16>
    %40 = vector.shape_cast %39 : vector<1x128x128xbf16> to vector<128x128xbf16>
    %cst_36 = arith.constant dense<0.000000e+00> : vector<16x128xf32>
    %41 = tpu.matmul %38, %40, %cst_36 {dimension_numbers = #tpu.dot_dimension_numbers<[1], [0], [0], [1], [0, 0, 1, 1], [], []>} : vector<16x128xbf16>, vector<128x128xbf16>, vector<16x128xf32> -> vector<16x128xf32>
    %42 = arith.addf %36, %41 : vector<16x128xf32>
    %c0_37 = arith.constant 0 : index
    %c6 = arith.constant 6 : index
    %c0_38 = arith.constant 0 : index
    %43 = vector.load %arg3[%c0_37, %c6, %c0_38] : memref<1x26x128xbf16, #tpu.memory_space<vmem>>, vector<1x16x128xbf16>
    %44 = vector.shape_cast %43 : vector<1x16x128xbf16> to vector<16x128xbf16>
    %c5_39 = arith.constant 5 : index
    %c0_40 = arith.constant 0 : index
    %c0_41 = arith.constant 0 : index
    %45 = vector.load %arg4[%c5_39, %c0_40, %c0_41] : memref<9x128x128xbf16, #tpu.memory_space<vmem>>, vector<1x128x128xbf16>
    %46 = vector.shape_cast %45 : vector<1x128x128xbf16> to vector<128x128xbf16>
    %cst_42 = arith.constant dense<0.000000e+00> : vector<16x128xf32>
    %47 = tpu.matmul %44, %46, %cst_42 {dimension_numbers = #tpu.dot_dimension_numbers<[1], [0], [0], [1], [0, 0, 1, 1], [], []>} : vector<16x128xbf16>, vector<128x128xbf16>, vector<16x128xf32> -> vector<16x128xf32>
    %c0_43 = arith.constant 0 : index
    %c0_44 = arith.constant 0 : index
    %48 = vector.load %arg6[%c0_43, %c0_44] : memref<16x1xf32, #tpu.memory_space<vmem>>, vector<16x1xf32>
    %49 = vector.broadcast %48 : vector<16x1xf32> to vector<16x128xf32>
    %50 = arith.mulf %47, %49 : vector<16x128xf32>
    %51 = arith.addf %42, %50 : vector<16x128xf32>
    %c0_45 = arith.constant 0 : index
    %c8 = arith.constant 8 : index
    %c0_46 = arith.constant 0 : index
    %52 = vector.load %arg3[%c0_45, %c8, %c0_46] : memref<1x26x128xbf16, #tpu.memory_space<vmem>>, vector<1x16x128xbf16>
    %53 = vector.shape_cast %52 : vector<1x16x128xbf16> to vector<16x128xbf16>
    %c6_47 = arith.constant 6 : index
    %c0_48 = arith.constant 0 : index
    %c0_49 = arith.constant 0 : index
    %54 = vector.load %arg4[%c6_47, %c0_48, %c0_49] : memref<9x128x128xbf16, #tpu.memory_space<vmem>>, vector<1x128x128xbf16>
    %55 = vector.shape_cast %54 : vector<1x128x128xbf16> to vector<128x128xbf16>
    %cst_50 = arith.constant dense<0.000000e+00> : vector<16x128xf32>
    %56 = tpu.matmul %53, %55, %cst_50 {dimension_numbers = #tpu.dot_dimension_numbers<[1], [0], [0], [1], [0, 0, 1, 1], [], []>} : vector<16x128xbf16>, vector<128x128xbf16>, vector<16x128xf32> -> vector<16x128xf32>
    %c0_51 = arith.constant 0 : index
    %c0_52 = arith.constant 0 : index
    %57 = vector.load %arg5[%c0_51, %c0_52] : memref<16x1xf32, #tpu.memory_space<vmem>>, vector<16x1xf32>
    %58 = vector.broadcast %57 : vector<16x1xf32> to vector<16x128xf32>
    %59 = arith.mulf %56, %58 : vector<16x128xf32>
    %60 = arith.addf %51, %59 : vector<16x128xf32>
    %c0_53 = arith.constant 0 : index
    %c9 = arith.constant 9 : index
    %c0_54 = arith.constant 0 : index
    %61 = vector.load %arg3[%c0_53, %c9, %c0_54] : memref<1x26x128xbf16, #tpu.memory_space<vmem>>, vector<1x16x128xbf16>
    %62 = vector.shape_cast %61 : vector<1x16x128xbf16> to vector<16x128xbf16>
    %c7 = arith.constant 7 : index
    %c0_55 = arith.constant 0 : index
    %c0_56 = arith.constant 0 : index
    %63 = vector.load %arg4[%c7, %c0_55, %c0_56] : memref<9x128x128xbf16, #tpu.memory_space<vmem>>, vector<1x128x128xbf16>
    %64 = vector.shape_cast %63 : vector<1x128x128xbf16> to vector<128x128xbf16>
    %cst_57 = arith.constant dense<0.000000e+00> : vector<16x128xf32>
    %65 = tpu.matmul %62, %64, %cst_57 {dimension_numbers = #tpu.dot_dimension_numbers<[1], [0], [0], [1], [0, 0, 1, 1], [], []>} : vector<16x128xbf16>, vector<128x128xbf16>, vector<16x128xf32> -> vector<16x128xf32>
    %66 = arith.addf %60, %65 : vector<16x128xf32>
    %c0_58 = arith.constant 0 : index
    %c10 = arith.constant 10 : index
    %c0_59 = arith.constant 0 : index
    %67 = vector.load %arg3[%c0_58, %c10, %c0_59] : memref<1x26x128xbf16, #tpu.memory_space<vmem>>, vector<1x16x128xbf16>
    %68 = vector.shape_cast %67 : vector<1x16x128xbf16> to vector<16x128xbf16>
    %c8_60 = arith.constant 8 : index
    %c0_61 = arith.constant 0 : index
    %c0_62 = arith.constant 0 : index
    %69 = vector.load %arg4[%c8_60, %c0_61, %c0_62] : memref<9x128x128xbf16, #tpu.memory_space<vmem>>, vector<1x128x128xbf16>
    %70 = vector.shape_cast %69 : vector<1x128x128xbf16> to vector<128x128xbf16>
    %cst_63 = arith.constant dense<0.000000e+00> : vector<16x128xf32>
    %71 = tpu.matmul %68, %70, %cst_63 {dimension_numbers = #tpu.dot_dimension_numbers<[1], [0], [0], [1], [0, 0, 1, 1], [], []>} : vector<16x128xbf16>, vector<128x128xbf16>, vector<16x128xf32> -> vector<16x128xf32>
    %c0_64 = arith.constant 0 : index
    %c0_65 = arith.constant 0 : index
    %72 = vector.load %arg6[%c0_64, %c0_65] : memref<16x1xf32, #tpu.memory_space<vmem>>, vector<16x1xf32>
    %73 = vector.broadcast %72 : vector<16x1xf32> to vector<16x128xf32>
    %74 = arith.mulf %71, %73 : vector<16x128xf32>
    %75 = arith.addf %66, %74 : vector<16x128xf32>
    %c0_66 = arith.constant 0 : index
    %c0_67 = arith.constant 0 : index
    %76 = vector.load %arg10[%c0_66, %c0_67] : memref<16x128xf32, #tpu.memory_space<vmem>>, vector<16x128xf32>
    tpu.vector_store %arg10[%c0_66, %c0_67], %75 {strides = array<i32>} : memref<16x128xf32, #tpu.memory_space<vmem>>, vector<16x128xf32>,
    %c0_i32_68 = arith.constant 0 : i32
    %77 = arith.cmpi eq, %arg2, %c0_i32_68 : i32
    %78 = arith.extui %77 : i1 to i32
    %c0_i32_69 = arith.constant 0 : i32
    %79 = arith.cmpi ne, %78, %c0_i32_69 : i32
    scf.if %79 {
      %c0_70 = arith.constant 0 : index
      %c0_71 = arith.constant 0 : index
      %80 = vector.load %arg10[%c0_70, %c0_71] : memref<16x128xf32, #tpu.memory_space<vmem>>, vector<16x128xf32>
      %c0_72 = arith.constant 0 : index
      %c0_73 = arith.constant 0 : index
      %81 = vector.load %arg7[%c0_72, %c0_73] : memref<1x128xf32, #tpu.memory_space<vmem>>, vector<1x128xf32>
      %82 = vector.broadcast %81 : vector<1x128xf32> to vector<16x128xf32>
      %83 = arith.mulf %80, %82 : vector<16x128xf32>
      %c0_74 = arith.constant 0 : index
      %c0_75 = arith.constant 0 : index
      %84 = vector.load %arg8[%c0_74, %c0_75] : memref<1x128xf32, #tpu.memory_space<vmem>>, vector<1x128xf32>
      %85 = vector.broadcast %84 : vector<1x128xf32> to vector<16x128xf32>
      %86 = arith.addf %83, %85 : vector<16x128xf32>
      %c0_76 = arith.constant 0 : index
      %c0_77 = arith.constant 0 : index
      %c0_78 = arith.constant 0 : index
      %87 = vector.load %arg9[%c0_76, %c0_77, %c0_78] : memref<1x16x128xf32, #tpu.memory_space<vmem>>, vector<1x16x128xf32>
      %88 = vector.shape_cast %87 : vector<1x16x128xf32> to vector<16x128xf32>
      %89 = vector.shape_cast %86 : vector<16x128xf32> to vector<1x16x128xf32>
      tpu.vector_store %arg9[%c0_76, %c0_77, %c0_78], %89 {strides = array<i32>} : memref<1x16x128xf32, #tpu.memory_space<vmem>>, vector<1x16x128xf32>,
    } else {
    }
    return
  }
  func.func @transform_0(%arg0: i32, %arg1: i32, %arg2: i32) -> (i32, i32, i32) {
    %c0_i32 = arith.constant 0 : i32
    %c0_i32_0 = arith.constant 0 : i32
    return %arg0, %c0_i32, %arg2 : i32, i32, i32
  }
  func.func @transform_1(%arg0: i32, %arg1: i32, %arg2: i32) -> (i32, i32, i32) {
    %c0_i32 = arith.constant 0 : i32
    %c0_i32_0 = arith.constant 0 : i32
    return %c0_i32, %arg2, %arg1 : i32, i32, i32
  }
  func.func @transform_2(%arg0: i32, %arg1: i32, %arg2: i32) -> (i32, i32) {
    %c0_i32 = arith.constant 0 : i32
    %c0_i32_0 = arith.constant 0 : i32
    %c0_i32_1 = arith.constant 0 : i32
    return %c0_i32, %c0_i32_0 : i32, i32
  }
  func.func @transform_3(%arg0: i32, %arg1: i32, %arg2: i32) -> (i32, i32) {
    %c0_i32 = arith.constant 0 : i32
    %c0_i32_0 = arith.constant 0 : i32
    %c0_i32_1 = arith.constant 0 : i32
    return %c0_i32, %c0_i32_0 : i32, i32
  }
  func.func @transform_4(%arg0: i32, %arg1: i32, %arg2: i32) -> (i32, i32) {
    %c0_i32 = arith.constant 0 : i32
    %c0_i32_0 = arith.constant 0 : i32
    return %c0_i32, %arg1 : i32, i32
  }
  func.func @transform_5(%arg0: i32, %arg1: i32, %arg2: i32) -> (i32, i32) {
    %c0_i32 = arith.constant 0 : i32
    %c0_i32_0 = arith.constant 0 : i32
    return %c0_i32, %arg1 : i32, i32
  }
  func.func @transform_6(%arg0: i32, %arg1: i32, %arg2: i32) -> (i32, i32, i32) {
    %c0_i32 = arith.constant 0 : i32
    %c0_i32_0 = arith.constant 0 : i32
    return %arg0, %c0_i32, %arg1 : i32, i32, i32
  }
}

</mosaic_0001>

<llo_original>
// kernel: tpu_custom_call.1
$region0: #{tpu_custom_call.1}
  #allocation0 [shape = 'u32[]', space=smem, size = 0x4, offset = 0x4, fixed_abs, tag = 'smem constant byte address 0x4 - core index']
  #allocation1 [shape = 'u32[144,128]{1,0:T(1,128)}', space=vmem, size = 0x12000, scoped, tag = 'internal scratch']
  #allocation2 [shape = 'f32[16,128]{1,0:T(8,128)}', space=vmem, size = 0x2000, scoped, tag = 'scratch operand']
  %s0 = inlined_call_operand.vmem [shape: bf16[1,26,128], index: 0, kind: input, shape index: {}]
  %s1 = inlined_call_operand.hbm [shape: bf16[9,128,128], index: 1, kind: input, shape index: {}]
  %s2 = inlined_call_operand.vmem [shape: f32[16,1], index: 2, kind: input, shape index: {}]
  %s3 = inlined_call_operand.vmem [shape: f32[16,1], index: 3, kind: input, shape index: {}]
  %s4 = inlined_call_operand.vmem [shape: f32[1,128], index: 4, kind: input, shape index: {}]
  %s5 = inlined_call_operand.vmem [shape: f32[1,128], index: 5, kind: input, shape index: {}]
  %s6 = inlined_call_operand.hbm [shape: f32[1,16,128], index: 6, kind: output, shape index: {}]
  %s7 = sld [smem:[#allocation0]]
  $region46: #{tpu_custom_call.1} parent=0
    _
  %s9 = ssub.s32 1, %s7
  %s10 = scalar_select 0, %s9, %s7
  $region1: #{tpu_custom_call.1} parent=0
    #allocation3 [shape = 'u8[294912]{0}', space=vmem, size = 0x48000, scoped, tag = 'input window, operand 1, single buffered']
    #allocation4 [shape = 's32[1]{0}', space=sflag, size = 0x4, scoped, tag = 'scoped memory for tpu_custom_call.1']
    #allocation5 [shape = 's32[1]{0}', space=sflag, size = 0x4, scoped, tag = 'scoped memory for tpu_custom_call.1']
    #allocation6 [shape = 'u8[8192]{0}', space=vmem, size = 0x2000, scoped, tag = 'output window, operand 0, single buffered']
    %11 = vsyncpa [#allocation4], 0
    %12 = vsyncpa [#allocation5], 0
    // Predicated region
    $region2: #{tpu_custom_call.1} parent=1 // pred_check
      _
    $region3: #{tpu_custom_call.1} parent=1 // pred_check_branch
      %14 = sbr.rel (0) target = $region5
    $region4: #{tpu_custom_call.1} parent=1 // pred_region
      _
    $region5: #{tpu_custom_call.1} parent=1 // pred_fallthru
      _
    // Predicated region
    $region6: #{tpu_custom_call.1} parent=1 // pred_check
      _
    $region7: #{tpu_custom_call.1} parent=1 // pred_check_branch
      %16 = sbr.rel (0) target = $region9
    $region8: #{tpu_custom_call.1} parent=1 // pred_region
      %s18 = ssub.s32 9216, 9216
      %19 = vsyncadd [#allocation4], %s18
      %s20 = sshll.u32 [#allocation3], 4
      %s21 = int_to_ptr.vmem [resolvable:$true] %s20
      %26 = dma.hbm_to_vmem [thread:$0]  %s1, 9216, %s21, [#allocation4], 64, 64, 4
    $region9: #{tpu_custom_call.1} parent=1 // pred_fallthru
      _
    // Predicated region
    $region10: #{tpu_custom_call.1} parent=1 // pred_check
      _
    $region11: #{tpu_custom_call.1} parent=1 // pred_check_branch
      %28 = sbr.rel (0) target = $region13
    $region12: #{tpu_custom_call.1} parent=1 // pred_region
      _
    $region13: #{tpu_custom_call.1} parent=1 // pred_fallthru
      _
    // Predicated region
    $region14: #{tpu_custom_call.1} parent=1 // pred_check
      _
    $region15: #{tpu_custom_call.1} parent=1 // pred_check_branch
      %30 = sbr.rel (0) target = $region17
    $region16: #{tpu_custom_call.1} parent=1 // pred_region
      _
    $region17: #{tpu_custom_call.1} parent=1 // pred_fallthru
      _
    // Predicated region
    $region18: #{tpu_custom_call.1} parent=1 // pred_check
      _
    $region19: #{tpu_custom_call.1} parent=1 // pred_check_branch
      %32 = sbr.rel (0) target = $region21
    $region20: #{tpu_custom_call.1} parent=1 // pred_region
      _
    $region21: #{tpu_custom_call.1} parent=1 // pred_fallthru
      _
    // Predicated region
    $region22: #{tpu_custom_call.1} parent=1 // pred_check
      _
    $region23: #{tpu_custom_call.1} parent=1 // pred_check_branch
      %34 = sbr.rel (0) target = $region25
    $region24: #{tpu_custom_call.1} parent=1 // pred_region
      _
    $region25: #{tpu_custom_call.1} parent=1 // pred_fallthru
      _
    // Predicated region
    $region26: #{tpu_custom_call.1} parent=1 // pred_check
      _
    $region27: #{tpu_custom_call.1} parent=1 // pred_check_branch
      %36 = sbr.rel (0) target = $region29
    $region28: #{tpu_custom_call.1} parent=1 // pred_region
      %37 = dma.done [#allocation4], 9216
    $region29: #{tpu_custom_call.1} parent=1 // pred_fallthru
      _
    %p39 = scmp.eq.s32.totalorder 0, 0
    // Predicated region
    $region30: #{tpu_custom_call.1} parent=1 // pred_check
      %p40 = pneg %p39
    $region31: #{tpu_custom_call.1} parent=1 // pred_check_branch
      %42 = sbr.rel (%p40) target = $region33
    $region32: #{tpu_custom_call.1} parent=1 // pred_region
      %43 = vst [vmem:[#allocation2] sm:$0xff] 0.0
      %44 = vst [vmem:[#allocation2 + $0x8] sm:$0xff] 0.0
    $region33: #{tpu_custom_call.1} parent=1 // pred_fallthru
      _
    %v45 = vld [vmem:[#allocation2] sm:$0xff]
    %v46 = vld [vmem:[#allocation2 + $0x8] sm:$0xff]
    %v47 = vld [vmem:[%s0] sm:$0xf]
    %v48 = vld [vmem:[%s0 + $0x4] sm:$0xf]
    %v49 = vld [vmem:[#allocation3] sm:$0xf]
    %v50 = vld [vmem:[#allocation3 + $0x4] sm:$0xf]
    %v51 = vld [vmem:[#allocation3 + $0x8] sm:$0xf]
    %v52 = vld [vmem:[#allocation3 + $0xc] sm:$0xf]
    %v53 = vld [vmem:[#allocation3 + $0x10] sm:$0xf]
    %v54 = vld [vmem:[#allocation3 + $0x14] sm:$0xf]
    %v55 = vld [vmem:[#allocation3 + $0x18] sm:$0xf]
    %v56 = vld [vmem:[#allocation3 + $0x1c] sm:$0xf]
    %v57 = vld [vmem:[#allocation3 + $0x20] sm:$0xf]
    %v58 = vld [vmem:[#allocation3 + $0x24] sm:$0xf]
    %v59 = vld [vmem:[#allocation3 + $0x28] sm:$0xf]
    %v60 = vld [vmem:[#allocation3 + $0x2c] sm:$0xf]
    %v61 = vld [vmem:[#allocation3 + $0x30] sm:$0xf]
    %v62 = vld [vmem:[#allocation3 + $0x34] sm:$0xf]
    %v63 = vld [vmem:[#allocation3 + $0x38] sm:$0xf]
    %v64 = vld [vmem:[#allocation3 + $0x3c] sm:$0xf]
    %v67 = vunpack.c.l.b16 %v47
    %v68 = vunpack.c.l.b16 %v48
    %v69 = vpack.c.b16 %v68, %v67
    %v87 = vunpack.c.l.b16 %v49
    %v88 = vunpack.c.l.b16 %v50
    %v89 = vunpack.c.l.b16 %v51
    %v90 = vunpack.c.l.b16 %v52
    %v91 = vunpack.c.l.b16 %v53
    %v92 = vunpack.c.l.b16 %v54
    %v93 = vunpack.c.l.b16 %v55
    %v94 = vunpack.c.l.b16 %v56
    %v95 = vunpack.c.l.b16 %v57
    %v96 = vunpack.c.l.b16 %v58
    %v97 = vunpack.c.l.b16 %v59
    %v98 = vunpack.c.l.b16 %v60
    %v99 = vunpack.c.l.b16 %v61
    %v100 = vunpack.c.l.b16 %v62
    %v101 = vunpack.c.l.b16 %v63
    %v102 = vunpack.c.l.b16 %v64
    %v103 = vpack.c.b16 %v88, %v87
    %v104 = vpack.c.b16 %v90, %v89
    %v105 = vpack.c.b16 %v92, %v91
    %v106 = vpack.c.b16 %v94, %v93
    %v107 = vpack.c.b16 %v96, %v95
    %v108 = vpack.c.b16 %v98, %v97
    %v109 = vpack.c.b16 %v100, %v99
    %v110 = vpack.c.b16 %v102, %v101
    %119 = vmatprep.subr.bf16.mxu0 0
    %120 = vmatpush1.bf16.msra.mxu0 %v103
    %121 = vmatprep.subr.bf16.mxu0 0
    %122 = vmatpush1.bf16.msra.mxu0 %v104
    %123 = vmatprep.subr.bf16.mxu0 0
    %124 = vmatpush1.bf16.msra.mxu0 %v105
    %125 = vmatprep.subr.bf16.mxu0 0
    %126 = vmatpush1.bf16.msra.mxu0 %v106
    %127 = vmatprep.subr.bf16.mxu0 0
    %128 = vmatpush1.bf16.msra.mxu0 %v107
    %129 = vmatprep.subr.bf16.mxu0 0
    %130 = vmatpush1.bf16.msra.mxu0 %v108
    %131 = vmatprep.subr.bf16.mxu0 0
    %132 = vmatpush1.bf16.msra.mxu0 %v109
    %133 = vmatprep.subr.bf16.mxu0 0
    %134 = vmatpush1.bf16.msra.mxu0 %v110
    %135 = vmatprep.subr.bf16.mxu0 0
    %136 = vmatpush1.bf16.msra.mxu0 0
    %137 = vmatprep.subr.bf16.mxu0 0
    %138 = vmatpush1.bf16.msra.mxu0 0
    %139 = vmatprep.subr.bf16.mxu0 0
    %140 = vmatpush1.bf16.msra.mxu0 0
    %141 = vmatprep.subr.bf16.mxu0 0
    %142 = vmatpush1.bf16.msra.mxu0 0
    %143 = vmatprep.subr.bf16.mxu0 0
    %144 = vmatpush1.bf16.msra.mxu0 0
    %145 = vmatprep.subr.bf16.mxu0 0
    %146 = vmatpush1.bf16.msra.mxu0 0
    %147 = vmatprep.subr.bf16.mxu0 0
    %148 = vmatpush1.bf16.msra.mxu0 0
    %149 = vmatprep.subr.bf16.mxu0 0
    %150 = vmatpush1.bf16.msra.mxu0 0
    %151 = vmatprep.mubr.bf16.mxu0 0
    %152 = vmatmul.mubr.bf16.gmra.mrb[0].mxu0 %v69
    %v153 = vpop.f32.mrb[0].mxu0
    %v154 = vadd.f32 0.0, %v153
    %v155 = vpop.f32.mrb[0].mxu0
    %v156 = vpop.f32.mrb[0].mxu0
    %v157 = vadd.f32 0.0, %v156
    %v158 = vpop.f32.mrb[0].mxu0
    %159 = vdwg.mxu0
    %v160 = vld [vmem:[%s2] sm:$0xff]
    %v161 = vld [vmem:[%s2 + $0x8] sm:$0xff]
    %163 = vset.pattern.permute.xlu0 0
    %164 = vperm.xlu0 %163, %v160
    %v165 = vpop.permute.xlu0 %164
    %168 = vset.pattern.permute.xlu0 0
    %169 = vperm.xlu0 %168, %v161
    %v170 = vpop.permute.xlu0 %169
    %v172 = vmul.f32 %v154, %v165
    %v173 = vmul.f32 %v157, %v170
    %v174 = vadd.f32 %v45, %v172
    %v175 = vadd.f32 %v46, %v173
    %v176 = vld [vmem:[%s0] sm:$0xf]
    %v177 = vld [vmem:[%s0 + $0x4] sm:$0xf]
    %v178 = vld [vmem:[%s0 + $0x8] sm:$0x1]
    %s179 = scalar_lea.vmem [#allocation3], 64
    %v180 = vld [vmem:[%s179] sm:$0xf]
    %v181 = vld [vmem:[%s179 + $0x4] sm:$0xf]
    %v182 = vld [vmem:[%s179 + $0x8] sm:$0xf]
    %v183 = vld [vmem:[%s179 + $0xc] sm:$0xf]
    %v184 = vld [vmem:[%s179 + $0x10] sm:$0xf]
    %v185 = vld [vmem:[%s179 + $0x14] sm:$0xf]
    %v186 = vld [vmem:[%s179 + $0x18] sm:$0xf]
    %v187 = vld [vmem:[%s179 + $0x1c] sm:$0xf]
    %v188 = vld [vmem:[%s179 + $0x20] sm:$0xf]
    %v189 = vld [vmem:[%s179 + $0x24] sm:$0xf]
    %v190 = vld [vmem:[%s179 + $0x28] sm:$0xf]
    %v191 = vld [vmem:[%s179 + $0x2c] sm:$0xf]
    %v192 = vld [vmem:[%s179 + $0x30] sm:$0xf]
    %v193 = vld [vmem:[%s179 + $0x34] sm:$0xf]
    %v194 = vld [vmem:[%s179 + $0x38] sm:$0xf]
    %v195 = vld [vmem:[%s179 + $0x3c] sm:$0xf]
    %v199 = vunpack.c.l.b16 %v176
    %v200 = vunpack.c.l.b16 %v177
    %v201 = vunpack.c.l.b16 %v178
    %v202 = vpack.c.b16 %v200, %v199
    %v203 = vpack.c.b16 %v201, %v201
    %vm204 = vsmask.f32 7424
    %v206 = vshrl.u32 %v202, 16
    %v208 = vshll.u32 %v202, 16
    %v210 = vrot.slane %v208, 1
    %v211 = vor.u32 %v206, %v210
    %v213 = vshll.u32 %v203, 16
    %v215 = vrot.slane %v213, 1
    %v216 = vsel %vm204, %v211, %v215
    %v234 = vunpack.c.l.b16 %v180
    %v235 = vunpack.c.l.b16 %v181
    %v236 = vunpack.c.l.b16 %v182
    %v237 = vunpack.c.l.b16 %v183
    %v238 = vunpack.c.l.b16 %v184
    %v239 = vunpack.c.l.b16 %v185
    %v240 = vunpack.c.l.b16 %v186
    %v241 = vunpack.c.l.b16 %v187
    %v242 = vunpack.c.l.b16 %v188
    %v243 = vunpack.c.l.b16 %v189
    %v244 = vunpack.c.l.b16 %v190
    %v245 = vunpack.c.l.b16 %v191
    %v246 = vunpack.c.l.b16 %v192
    %v247 = vunpack.c.l.b16 %v193
    %v248 = vunpack.c.l.b16 %v194
    %v249 = vunpack.c.l.b16 %v195
    %v250 = vpack.c.b16 %v235, %v234
    %v251 = vpack.c.b16 %v237, %v236
    %v252 = vpack.c.b16 %v239, %v238
    %v253 = vpack.c.b16 %v241, %v240
    %v254 = vpack.c.b16 %v243, %v242
    %v255 = vpack.c.b16 %v245, %v244
    %v256 = vpack.c.b16 %v247, %v246
    %v257 = vpack.c.b16 %v249, %v248
    %266 = vmatprep.subr.bf16.mxu0 0
    %267 = vmatpush1.bf16.msra.mxu0 %v250
    %268 = vmatprep.subr.bf16.mxu0 0
    %269 = vmatpush1.bf16.msra.mxu0 %v251
    %270 = vmatprep.subr.bf16.mxu0 0
    %271 = vmatpush1.bf16.msra.mxu0 %v252
    %272 = vmatprep.subr.bf16.mxu0 0
    %273 = vmatpush1.bf16.msra.mxu0 %v253
    %274 = vmatprep.subr.bf16.mxu0 0
    %275 = vmatpush1.bf16.msra.mxu0 %v254
    %276 = vmatprep.subr.bf16.mxu0 0
    %277 = vmatpush1.bf16.msra.mxu0 %v255
    %278 = vmatprep.subr.bf16.mxu0 0
    %279 = vmatpush1.bf16.msra.mxu0 %v256
    %280 = vmatprep.subr.bf16.mxu0 0
    %281 = vmatpush1.bf16.msra.mxu0 %v257
    %282 = vmatprep.subr.bf16.mxu0 0
    %283 = vmatpush1.bf16.msra.mxu0 0
    %284 = vmatprep.subr.bf16.mxu0 0
    %285 = vmatpush1.bf16.msra.mxu0 0
    %286 = vmatprep.subr.bf16.mxu0 0
    %287 = vmatpush1.bf16.msra.mxu0 0
    %288 = vmatprep.subr.bf16.mxu0 0
    %289 = vmatpush1.bf16.msra.mxu0 0
    %290 = vmatprep.subr.bf16.mxu0 0
    %291 = vmatpush1.bf16.msra.mxu0 0
    %292 = vmatprep.subr.bf16.mxu0 0
    %293 = vmatpush1.bf16.msra.mxu0 0
    %294 = vmatprep.subr.bf16.mxu0 0
    %295 = vmatpush1.bf16.msra.mxu0 0
    %296 = vmatprep.subr.bf16.mxu0 0
    %297 = vmatpush1.bf16.msra.mxu0 0
    %298 = vmatprep.mubr.bf16.mxu0 0
    %299 = vmatmul.mubr.bf16.gmra.mrb[0].mxu0 %v216
    %v300 = vpop.f32.mrb[0].mxu0
    %v301 = vadd.f32 0.0, %v300
    %v302 = vpop.f32.mrb[0].mxu0
    %v303 = vpop.f32.mrb[0].mxu0
    %v304 = vadd.f32 0.0, %v303
    %v305 = vpop.f32.mrb[0].mxu0
    %306 = vdwg.mxu0
    %v307 = vadd.f32 %v174, %v301
    %v308 = vadd.f32 %v175, %v304
    %v309 = vld [vmem:[%s0] sm:$0xe]
    %s310 = scalar_lea.vmem [#allocation3], 128
    %v311 = vld [vmem:[%s310] sm:$0xf]
    %v312 = vld [vmem:[%s310 + $0x4] sm:$0xf]
    %v313 = vld [vmem:[%s310 + $0x8] sm:$0xf]
    %v314 = vld [vmem:[%s310 + $0xc] sm:$0xf]
    %v315 = vld [vmem:[%s310 + $0x10] sm:$0xf]
    %v316 = vld [vmem:[%s310 + $0x14] sm:$0xf]
    %v317 = vld [vmem:[%s310 + $0x18] sm:$0xf]
    %v318 = vld [vmem:[%s310 + $0x1c] sm:$0xf]
    %v319 = vld [vmem:[%s310 + $0x20] sm:$0xf]
    %v320 = vld [vmem:[%s310 + $0x24] sm:$0xf]
    %v321 = vld [vmem:[%s310 + $0x28] sm:$0xf]
    %v322 = vld [vmem:[%s310 + $0x2c] sm:$0xf]
    %v323 = vld [vmem:[%s310 + $0x30] sm:$0xf]
    %v324 = vld [vmem:[%s310 + $0x34] sm:$0xf]
    %v325 = vld [vmem:[%s310 + $0x38] sm:$0xf]
    %v326 = vld [vmem:[%s310 + $0x3c] sm:$0xf]
    %v328 = vunpack.c.l.b16 %v309
    %v329 = vpack.c.b16 %v200, %v328
    %vm330 = vcmask 1046528
    %v331 = vrot.slane %v329, 1
    %v332 = vrot.slane %v203, 1
    %v333 = vsel %vm330, %v331, %v332
    %v351 = vunpack.c.l.b16 %v311
    %v352 = vunpack.c.l.b16 %v312
    %v353 = vunpack.c.l.b16 %v313
    %v354 = vunpack.c.l.b16 %v314
    %v355 = vunpack.c.l.b16 %v315
    %v356 = vunpack.c.l.b16 %v316
    %v357 = vunpack.c.l.b16 %v317
    %v358 = vunpack.c.l.b16 %v318
    %v359 = vunpack.c.l.b16 %v319
    %v360 = vunpack.c.l.b16 %v320
    %v361 = vunpack.c.l.b16 %v321
    %v362 = vunpack.c.l.b16 %v322
    %v363 = vunpack.c.l.b16 %v323
    %v364 = vunpack.c.l.b16 %v324
    %v365 = vunpack.c.l.b16 %v325
    %v366 = vunpack.c.l.b16 %v326
    %v367 = vpack.c.b16 %v352, %v351
    %v368 = vpack.c.b16 %v354, %v353
    %v369 = vpack.c.b16 %v356, %v355
    %v370 = vpack.c.b16 %v358, %v357
    %v371 = vpack.c.b16 %v360, %v359
    %v372 = vpack.c.b16 %v362, %v361
    %v373 = vpack.c.b16 %v364, %v363
    %v374 = vpack.c.b16 %v366, %v365
    %383 = vmatprep.subr.bf16.mxu0 0
    %384 = vmatpush1.bf16.msra.mxu0 %v367
    %385 = vmatprep.subr.bf16.mxu0 0
    %386 = vmatpush1.bf16.msra.mxu0 %v368
    %387 = vmatprep.subr.bf16.mxu0 0
    %388 = vmatpush1.bf16.msra.mxu0 %v369
    %389 = vmatprep.subr.bf16.mxu0 0
    %390 = vmatpush1.bf16.msra.mxu0 %v370
    %391 = vmatprep.subr.bf16.mxu0 0
    %392 = vmatpush1.bf16.msra.mxu0 %v371
    %393 = vmatprep.subr.bf16.mxu0 0
    %394 = vmatpush1.bf16.msra.mxu0 %v372
    %395 = vmatprep.subr.bf16.mxu0 0
    %396 = vmatpush1.bf16.msra.mxu0 %v373
    %397 = vmatprep.subr.bf16.mxu0 0
    %398 = vmatpush1.bf16.msra.mxu0 %v374
    %399 = vmatprep.subr.bf16.mxu0 0
    %400 = vmatpush1.bf16.msra.mxu0 0
    %401 = vmatprep.subr.bf16.mxu0 0
    %402 = vmatpush1.bf16.msra.mxu0 0
    %403 = vmatprep.subr.bf16.mxu0 0
    %404 = vmatpush1.bf16.msra.mxu0 0
    %405 = vmatprep.subr.bf16.mxu0 0
    %406 = vmatpush1.bf16.msra.mxu0 0
    %407 = vmatprep.subr.bf16.mxu0 0
    %408 = vmatpush1.bf16.msra.mxu0 0
    %409 = vmatprep.subr.bf16.mxu0 0
    %410 = vmatpush1.bf16.msra.mxu0 0
    %411 = vmatprep.subr.bf16.mxu0 0
    %412 = vmatpush1.bf16.msra.mxu0 0
    %413 = vmatprep.subr.bf16.mxu0 0
    %414 = vmatpush1.bf16.msra.mxu0 0
    %415 = vmatprep.mubr.bf16.mxu0 0
    %416 = vmatmul.mubr.bf16.gmra.mrb[0].mxu0 %v333
    %v417 = vpop.f32.mrb[0].mxu0
    %v418 = vadd.f32 0.0, %v417
    %v419 = vpop.f32.mrb[0].mxu0
    %v420 = vpop.f32.mrb[0].mxu0
    %v421 = vadd.f32 0.0, %v420
    %v422 = vpop.f32.mrb[0].mxu0
    %423 = vdwg.mxu0
    %v424 = vld [vmem:[%s3] sm:$0xff]
    %v425 = vld [vmem:[%s3 + $0x8] sm:$0xff]
    %427 = vset.pattern.permute.xlu0 0
    %428 = vperm.xlu0 %427, %v424
    %v429 = vpop.permute.xlu0 %428
    %432 = vset.pattern.permute.xlu0 0
    %433 = vperm.xlu0 %432, %v425
    %v434 = vpop.permute.xlu0 %433
    %v436 = vmul.f32 %v418, %v429
    %v437 = vmul.f32 %v421, %v434
    %v438 = vadd.f32 %v307, %v436
    %v439 = vadd.f32 %v308, %v437
    %v440 = vld [vmem:[%s0] sm:$0xc]
    %v441 = vld [vmem:[%s0 + $0x8] sm:$0x3]
    %s442 = scalar_lea.vmem [#allocation3], 192
    %v443 = vld [vmem:[%s442] sm:$0xf]
    %v444 = vld [vmem:[%s442 + $0x4] sm:$0xf]
    %v445 = vld [vmem:[%s442 + $0x8] sm:$0xf]
    %v446 = vld [vmem:[%s442 + $0xc] sm:$0xf]
    %v447 = vld [vmem:[%s442 + $0x10] sm:$0xf]
    %v448 = vld [vmem:[%s442 + $0x14] sm:$0xf]
    %v449 = vld [vmem:[%s442 + $0x18] sm:$0xf]
    %v450 = vld [vmem:[%s442 + $0x1c] sm:$0xf]
    %v451 = vld [vmem:[%s442 + $0x20] sm:$0xf]
    %v452 = vld [vmem:[%s442 + $0x24] sm:$0xf]
    %v453 = vld [vmem:[%s442 + $0x28] sm:$0xf]
    %v454 = vld [vmem:[%s442 + $0x2c] sm:$0xf]
    %v455 = vld [vmem:[%s442 + $0x30] sm:$0xf]
    %v456 = vld [vmem:[%s442 + $0x34] sm:$0xf]
    %v457 = vld [vmem:[%s442 + $0x38] sm:$0xf]
    %v458 = vld [vmem:[%s442 + $0x3c] sm:$0xf]
    %v461 = vunpack.c.l.b16 %v440
    %v462 = vunpack.c.l.b16 %v441
    %v463 = vpack.c.b16 %v200, %v461
    %v464 = vpack.c.b16 %v462, %v462
    %vm465 = vcmask 1045504
    %v466 = vrot.slane %v463, 2
    %v467 = vrot.slane %v464, 2
    %v468 = vsel %vm465, %v466, %v467
    %v486 = vunpack.c.l.b16 %v443
    %v487 = vunpack.c.l.b16 %v444
    %v488 = vunpack.c.l.b16 %v445
    %v489 = vunpack.c.l.b16 %v446
    %v490 = vunpack.c.l.b16 %v447
    %v491 = vunpack.c.l.b16 %v448
    %v492 = vunpack.c.l.b16 %v449
    %v493 = vunpack.c.l.b16 %v450
    %v494 = vunpack.c.l.b16 %v451
    %v495 = vunpack.c.l.b16 %v452
    %v496 = vunpack.c.l.b16 %v453
    %v497 = vunpack.c.l.b16 %v454
    %v498 = vunpack.c.l.b16 %v455
    %v499 = vunpack.c.l.b16 %v456
    %v500 = vunpack.c.l.b16 %v457
    %v501 = vunpack.c.l.b16 %v458
    %v502 = vpack.c.b16 %v487, %v486
    %v503 = vpack.c.b16 %v489, %v488
    %v504 = vpack.c.b16 %v491, %v490
    %v505 = vpack.c.b16 %v493, %v492
    %v506 = vpack.c.b16 %v495, %v494
    %v507 = vpack.c.b16 %v497, %v496
    %v508 = vpack.c.b16 %v499, %v498
    %v509 = vpack.c.b16 %v501, %v500
    %518 = vmatprep.subr.bf16.mxu0 0
    %519 = vmatpush1.bf16.msra.mxu0 %v502
    %520 = vmatprep.subr.bf16.mxu0 0
    %521 = vmatpush1.bf16.msra.mxu0 %v503
    %522 = vmatprep.subr.bf16.mxu0 0
    %523 = vmatpush1.bf16.msra.mxu0 %v504
    %524 = vmatprep.subr.bf16.mxu0 0
    %525 = vmatpush1.bf16.msra.mxu0 %v505
    %526 = vmatprep.subr.bf16.mxu0 0
    %527 = vmatpush1.bf16.msra.mxu0 %v506
    %528 = vmatprep.subr.bf16.mxu0 0
    %529 = vmatpush1.bf16.msra.mxu0 %v507
    %530 = vmatprep.subr.bf16.mxu0 0
    %531 = vmatpush1.bf16.msra.mxu0 %v508
    %532 = vmatprep.subr.bf16.mxu0 0
    %533 = vmatpush1.bf16.msra.mxu0 %v509
    %534 = vmatprep.subr.bf16.mxu0 0
    %535 = vmatpush1.bf16.msra.mxu0 0
    %536 = vmatprep.subr.bf16.mxu0 0
    %537 = vmatpush1.bf16.msra.mxu0 0
    %538 = vmatprep.subr.bf16.mxu0 0
    %539 = vmatpush1.bf16.msra.mxu0 0
    %540 = vmatprep.subr.bf16.mxu0 0
    %541 = vmatpush1.bf16.msra.mxu0 0
    %542 = vmatprep.subr.bf16.mxu0 0
    %543 = vmatpush1.bf16.msra.mxu0 0
    %544 = vmatprep.subr.bf16.mxu0 0
    %545 = vmatpush1.bf16.msra.mxu0 0
    %546 = vmatprep.subr.bf16.mxu0 0
    %547 = vmatpush1.bf16.msra.mxu0 0
    %548 = vmatprep.subr.bf16.mxu0 0
    %549 = vmatpush1.bf16.msra.mxu0 0
    %550 = vmatprep.mubr.bf16.mxu0 0
    %551 = vmatmul.mubr.bf16.gmra.mrb[0].mxu0 %v468
    %v552 = vpop.f32.mrb[0].mxu0
    %v553 = vadd.f32 0.0, %v552
    %v554 = vpop.f32.mrb[0].mxu0
    %v555 = vpop.f32.mrb[0].mxu0
    %v556 = vadd.f32 0.0, %v555
    %v557 = vpop.f32.mrb[0].mxu0
    %558 = vdwg.mxu0
    %v559 = vmul.f32 %v553, %v165
    %v560 = vmul.f32 %v556, %v170
    %v561 = vadd.f32 %v438, %v559
    %v562 = vadd.f32 %v439, %v560
    %v563 = vld [vmem:[%s0 + $0x8] sm:$0x7]
    %s564 = scalar_lea.vmem [#allocation3], 256
    %v565 = vld [vmem:[%s564] sm:$0xf]
    %v566 = vld [vmem:[%s564 + $0x4] sm:$0xf]
    %v567 = vld [vmem:[%s564 + $0x8] sm:$0xf]
    %v568 = vld [vmem:[%s564 + $0xc] sm:$0xf]
    %v569 = vld [vmem:[%s564 + $0x10] sm:$0xf]
    %v570 = vld [vmem:[%s564 + $0x14] sm:$0xf]
    %v571 = vld [vmem:[%s564 + $0x18] sm:$0xf]
    %v572 = vld [vmem:[%s564 + $0x1c] sm:$0xf]
    %v573 = vld [vmem:[%s564 + $0x20] sm:$0xf]
    %v574 = vld [vmem:[%s564 + $0x24] sm:$0xf]
    %v575 = vld [vmem:[%s564 + $0x28] sm:$0xf]
    %v576 = vld [vmem:[%s564 + $0x2c] sm:$0xf]
    %v577 = vld [vmem:[%s564 + $0x30] sm:$0xf]
    %v578 = vld [vmem:[%s564 + $0x34] sm:$0xf]
    %v579 = vld [vmem:[%s564 + $0x38] sm:$0xf]
    %v580 = vld [vmem:[%s564 + $0x3c] sm:$0xf]
    %v582 = vunpack.c.l.b16 %v563
    %v583 = vpack.c.b16 %v582, %v582
    %vm584 = vsmask.f32 5376
    %v586 = vshrl.u32 %v463, 16
    %v588 = vrot.slane %v586, 2
    %v589 = vshll.u32 %v463, 16
    %v591 = vrot.slane %v589, 3
    %v592 = vor.u32 %v588, %v591
    %v594 = vshrl.u32 %v583, 16
    %v596 = vrot.slane %v594, 2
    %v597 = vshll.u32 %v583, 16
    %v599 = vrot.slane %v597, 3
    %v600 = vor.u32 %v596, %v599
    %v601 = vsel %vm584, %v592, %v600
    %v619 = vunpack.c.l.b16 %v565
    %v620 = vunpack.c.l.b16 %v566
    %v621 = vunpack.c.l.b16 %v567
    %v622 = vunpack.c.l.b16 %v568
    %v623 = vunpack.c.l.b16 %v569
    %v624 = vunpack.c.l.b16 %v570
    %v625 = vunpack.c.l.b16 %v571
    %v626 = vunpack.c.l.b16 %v572
    %v627 = vunpack.c.l.b16 %v573
    %v628 = vunpack.c.l.b16 %v574
    %v629 = vunpack.c.l.b16 %v575
    %v630 = vunpack.c.l.b16 %v576
    %v631 = vunpack.c.l.b16 %v577
    %v632 = vunpack.c.l.b16 %v578
    %v633 = vunpack.c.l.b16 %v579
    %v634 = vunpack.c.l.b16 %v580
    %v635 = vpack.c.b16 %v620, %v619
    %v636 = vpack.c.b16 %v622, %v621
    %v637 = vpack.c.b16 %v624, %v623
    %v638 = vpack.c.b16 %v626, %v625
    %v639 = vpack.c.b16 %v628, %v627
    %v640 = vpack.c.b16 %v630, %v629
    %v641 = vpack.c.b16 %v632, %v631
    %v642 = vpack.c.b16 %v634, %v633
    %651 = vmatprep.subr.bf16.mxu0 0
    %652 = vmatpush1.bf16.msra.mxu0 %v635
    %653 = vmatprep.subr.bf16.mxu0 0
    %654 = vmatpush1.bf16.msra.mxu0 %v636
    %655 = vmatprep.subr.bf16.mxu0 0
    %656 = vmatpush1.bf16.msra.mxu0 %v637
    %657 = vmatprep.subr.bf16.mxu0 0
    %658 = vmatpush1.bf16.msra.mxu0 %v638
    %659 = vmatprep.subr.bf16.mxu0 0
    %660 = vmatpush1.bf16.msra.mxu0 %v639
    %661 = vmatprep.subr.bf16.mxu0 0
    %662 = vmatpush1.bf16.msra.mxu0 %v640
    %663 = vmatprep.subr.bf16.mxu0 0
    %664 = vmatpush1.bf16.msra.mxu0 %v641
    %665 = vmatprep.subr.bf16.mxu0 0
    %666 = vmatpush1.bf16.msra.mxu0 %v642
    %667 = vmatprep.subr.bf16.mxu0 0
    %668 = vmatpush1.bf16.msra.mxu0 0
    %669 = vmatprep.subr.bf16.mxu0 0
    %670 = vmatpush1.bf16.msra.mxu0 0
    %671 = vmatprep.subr.bf16.mxu0 0
    %672 = vmatpush1.bf16.msra.mxu0 0
    %673 = vmatprep.subr.bf16.mxu0 0
    %674 = vmatpush1.bf16.msra.mxu0 0
    %675 = vmatprep.subr.bf16.mxu0 0
    %676 = vmatpush1.bf16.msra.mxu0 0
    %677 = vmatprep.subr.bf16.mxu0 0
    %678 = vmatpush1.bf16.msra.mxu0 0
    %679 = vmatprep.subr.bf16.mxu0 0
    %680 = vmatpush1.bf16.msra.mxu0 0
    %681 = vmatprep.subr.bf16.mxu0 0
    %682 = vmatpush1.bf16.msra.mxu0 0
    %683 = vmatprep.mubr.bf16.mxu0 0
    %684 = vmatmul.mubr.bf16.gmra.mrb[0].mxu0 %v601
    %v685 = vpop.f32.mrb[0].mxu0
    %v686 = vadd.f32 0.0, %v685
    %v687 = vpop.f32.mrb[0].mxu0
    %v688 = vpop.f32.mrb[0].mxu0
    %v689 = vadd.f32 0.0, %v688
    %v690 = vpop.f32.mrb[0].mxu0
    %691 = vdwg.mxu0
    %v692 = vadd.f32 %v561, %v686
    %v693 = vadd.f32 %v562, %v689
    %v694 = vld [vmem:[%s0] sm:$0x8]
    %s695 = scalar_lea.vmem [#allocation3], 320
    %v696 = vld [vmem:[%s695] sm:$0xf]
    %v697 = vld [vmem:[%s695 + $0x4] sm:$0xf]
    %v698 = vld [vmem:[%s695 + $0x8] sm:$0xf]
    %v699 = vld [vmem:[%s695 + $0xc] sm:$0xf]
    %v700 = vld [vmem:[%s695 + $0x10] sm:$0xf]
    %v701 = vld [vmem:[%s695 + $0x14] sm:$0xf]
    %v702 = vld [vmem:[%s695 + $0x18] sm:$0xf]
    %v703 = vld [vmem:[%s695 + $0x1c] sm:$0xf]
    %v704 = vld [vmem:[%s695 + $0x20] sm:$0xf]
    %v705 = vld [vmem:[%s695 + $0x24] sm:$0xf]
    %v706 = vld [vmem:[%s695 + $0x28] sm:$0xf]
    %v707 = vld [vmem:[%s695 + $0x2c] sm:$0xf]
    %v708 = vld [vmem:[%s695 + $0x30] sm:$0xf]
    %v709 = vld [vmem:[%s695 + $0x34] sm:$0xf]
    %v710 = vld [vmem:[%s695 + $0x38] sm:$0xf]
    %v711 = vld [vmem:[%s695 + $0x3c] sm:$0xf]
    %v713 = vunpack.c.l.b16 %v694
    %v714 = vpack.c.b16 %v200, %v713
    %vm715 = vcmask 1044480
    %v716 = vrot.slane %v714, 3
    %v717 = vrot.slane %v583, 3
    %v718 = vsel %vm715, %v716, %v717
    %v736 = vunpack.c.l.b16 %v696
    %v737 = vunpack.c.l.b16 %v697
    %v738 = vunpack.c.l.b16 %v698
    %v739 = vunpack.c.l.b16 %v699
    %v740 = vunpack.c.l.b16 %v700
    %v741 = vunpack.c.l.b16 %v701
    %v742 = vunpack.c.l.b16 %v702
    %v743 = vunpack.c.l.b16 %v703
    %v744 = vunpack.c.l.b16 %v704
    %v745 = vunpack.c.l.b16 %v705
    %v746 = vunpack.c.l.b16 %v706
    %v747 = vunpack.c.l.b16 %v707
    %v748 = vunpack.c.l.b16 %v708
    %v749 = vunpack.c.l.b16 %v709
    %v750 = vunpack.c.l.b16 %v710
    %v751 = vunpack.c.l.b16 %v711
    %v752 = vpack.c.b16 %v737, %v736
    %v753 = vpack.c.b16 %v739, %v738
    %v754 = vpack.c.b16 %v741, %v740
    %v755 = vpack.c.b16 %v743, %v742
    %v756 = vpack.c.b16 %v745, %v744
    %v757 = vpack.c.b16 %v747, %v746
    %v758 = vpack.c.b16 %v749, %v748
    %v759 = vpack.c.b16 %v751, %v750
    %768 = vmatprep.subr.bf16.mxu0 0
    %769 = vmatpush1.bf16.msra.mxu0 %v752
    %770 = vmatprep.subr.bf16.mxu0 0
    %771 = vmatpush1.bf16.msra.mxu0 %v753
    %772 = vmatprep.subr.bf16.mxu0 0
    %773 = vmatpush1.bf16.msra.mxu0 %v754
    %774 = vmatprep.subr.bf16.mxu0 0
    %775 = vmatpush1.bf16.msra.mxu0 %v755
    %776 = vmatprep.subr.bf16.mxu0 0
    %777 = vmatpush1.bf16.msra.mxu0 %v756
    %778 = vmatprep.subr.bf16.mxu0 0
    %779 = vmatpush1.bf16.msra.mxu0 %v757
    %780 = vmatprep.subr.bf16.mxu0 0
    %781 = vmatpush1.bf16.msra.mxu0 %v758
    %782 = vmatprep.subr.bf16.mxu0 0
    %783 = vmatpush1.bf16.msra.mxu0 %v759
    %784 = vmatprep.subr.bf16.mxu0 0
    %785 = vmatpush1.bf16.msra.mxu0 0
    %786 = vmatprep.subr.bf16.mxu0 0
    %787 = vmatpush1.bf16.msra.mxu0 0
    %788 = vmatprep.subr.bf16.mxu0 0
    %789 = vmatpush1.bf16.msra.mxu0 0
    %790 = vmatprep.subr.bf16.mxu0 0
    %791 = vmatpush1.bf16.msra.mxu0 0
    %792 = vmatprep.subr.bf16.mxu0 0
    %793 = vmatpush1.bf16.msra.mxu0 0
    %794 = vmatprep.subr.bf16.mxu0 0
    %795 = vmatpush1.bf16.msra.mxu0 0
    %796 = vmatprep.subr.bf16.mxu0 0
    %797 = vmatpush1.bf16.msra.mxu0 0
    %798 = vmatprep.subr.bf16.mxu0 0
    %799 = vmatpush1.bf16.msra.mxu0 0
    %800 = vmatprep.mubr.bf16.mxu0 0
    %801 = vmatmul.mubr.bf16.gmra.mrb[0].mxu0 %v718
    %v802 = vpop.f32.mrb[0].mxu0
    %v803 = vadd.f32 0.0, %v802
    %v804 = vpop.f32.mrb[0].mxu0
    %v805 = vpop.f32.mrb[0].mxu0
    %v806 = vadd.f32 0.0, %v805
    %v807 = vpop.f32.mrb[0].mxu0
    %808 = vdwg.mxu0
    %v809 = vmul.f32 %v803, %v429
    %v810 = vmul.f32 %v806, %v434
    %v811 = vadd.f32 %v692, %v809
    %v812 = vadd.f32 %v693, %v810
    %v813 = vld [vmem:[%s0 + $0x8] sm:$0xf]
    %s814 = scalar_lea.vmem [#allocation3], 384
    %v815 = vld [vmem:[%s814] sm:$0xf]
    %v816 = vld [vmem:[%s814 + $0x4] sm:$0xf]
    %v817 = vld [vmem:[%s814 + $0x8] sm:$0xf]
    %v818 = vld [vmem:[%s814 + $0xc] sm:$0xf]
    %v819 = vld [vmem:[%s814 + $0x10] sm:$0xf]
    %v820 = vld [vmem:[%s814 + $0x14] sm:$0xf]
    %v821 = vld [vmem:[%s814 + $0x18] sm:$0xf]
    %v822 = vld [vmem:[%s814 + $0x1c] sm:$0xf]
    %v823 = vld [vmem:[%s814 + $0x20] sm:$0xf]
    %v824 = vld [vmem:[%s814 + $0x24] sm:$0xf]
    %v825 = vld [vmem:[%s814 + $0x28] sm:$0xf]
    %v826 = vld [vmem:[%s814 + $0x2c] sm:$0xf]
    %v827 = vld [vmem:[%s814 + $0x30] sm:$0xf]
    %v828 = vld [vmem:[%s814 + $0x34] sm:$0xf]
    %v829 = vld [vmem:[%s814 + $0x38] sm:$0xf]
    %v830 = vld [vmem:[%s814 + $0x3c] sm:$0xf]
    %v832 = vunpack.c.l.b16 %v813
    %v833 = vpack.c.b16 %v832, %v200
    %v851 = vunpack.c.l.b16 %v815
    %v852 = vunpack.c.l.b16 %v816
    %v853 = vunpack.c.l.b16 %v817
    %v854 = vunpack.c.l.b16 %v818
    %v855 = vunpack.c.l.b16 %v819
    %v856 = vunpack.c.l.b16 %v820
    %v857 = vunpack.c.l.b16 %v821
    %v858 = vunpack.c.l.b16 %v822
    %v859 = vunpack.c.l.b16 %v823
    %v860 = vunpack.c.l.b16 %v824
    %v861 = vunpack.c.l.b16 %v825
    %v862 = vunpack.c.l.b16 %v826
    %v863 = vunpack.c.l.b16 %v827
    %v864 = vunpack.c.l.b16 %v828
    %v865 = vunpack.c.l.b16 %v829
    %v866 = vunpack.c.l.b16 %v830
    %v867 = vpack.c.b16 %v852, %v851
    %v868 = vpack.c.b16 %v854, %v853
    %v869 = vpack.c.b16 %v856, %v855
    %v870 = vpack.c.b16 %v858, %v857
    %v871 = vpack.c.b16 %v860, %v859
    %v872 = vpack.c.b16 %v862, %v861
    %v873 = vpack.c.b16 %v864, %v863
    %v874 = vpack.c.b16 %v866, %v865
    %883 = vmatprep.subr.bf16.mxu0 0
    %884 = vmatpush1.bf16.msra.mxu0 %v867
    %885 = vmatprep.subr.bf16.mxu0 0
    %886 = vmatpush1.bf16.msra.mxu0 %v868
    %887 = vmatprep.subr.bf16.mxu0 0
    %888 = vmatpush1.bf16.msra.mxu0 %v869
    %889 = vmatprep.subr.bf16.mxu0 0
    %890 = vmatpush1.bf16.msra.mxu0 %v870
    %891 = vmatprep.subr.bf16.mxu0 0
    %892 = vmatpush1.bf16.msra.mxu0 %v871
    %893 = vmatprep.subr.bf16.mxu0 0
    %894 = vmatpush1.bf16.msra.mxu0 %v872
    %895 = vmatprep.subr.bf16.mxu0 0
    %896 = vmatpush1.bf16.msra.mxu0 %v873
    %897 = vmatprep.subr.bf16.mxu0 0
    %898 = vmatpush1.bf16.msra.mxu0 %v874
    %899 = vmatprep.subr.bf16.mxu0 0
    %900 = vmatpush1.bf16.msra.mxu0 0
    %901 = vmatprep.subr.bf16.mxu0 0
    %902 = vmatpush1.bf16.msra.mxu0 0
    %903 = vmatprep.subr.bf16.mxu0 0
    %904 = vmatpush1.bf16.msra.mxu0 0
    %905 = vmatprep.subr.bf16.mxu0 0
    %906 = vmatpush1.bf16.msra.mxu0 0
    %907 = vmatprep.subr.bf16.mxu0 0
    %908 = vmatpush1.bf16.msra.mxu0 0
    %909 = vmatprep.subr.bf16.mxu0 0
    %910 = vmatpush1.bf16.msra.mxu0 0
    %911 = vmatprep.subr.bf16.mxu0 0
    %912 = vmatpush1.bf16.msra.mxu0 0
    %913 = vmatprep.subr.bf16.mxu0 0
    %914 = vmatpush1.bf16.msra.mxu0 0
    %915 = vmatprep.mubr.bf16.mxu0 0
    %916 = vmatmul.mubr.bf16.gmra.mrb[0].mxu0 %v833
    %v917 = vpop.f32.mrb[0].mxu0
    %v918 = vadd.f32 0.0, %v917
    %v919 = vpop.f32.mrb[0].mxu0
    %v920 = vpop.f32.mrb[0].mxu0
    %v921 = vadd.f32 0.0, %v920
    %v922 = vpop.f32.mrb[0].mxu0
    %923 = vdwg.mxu0
    %v924 = vmul.f32 %v918, %v165
    %v925 = vmul.f32 %v921, %v170
    %v926 = vadd.f32 %v811, %v924
    %v927 = vadd.f32 %v812, %v925
    %v928 = vld [vmem:[%s0 + $0x4] sm:$0xf]
    %v929 = vld [vmem:[%s0 + $0x8] sm:$0xf]
    %v930 = vld [vmem:[%s0 + $0xc] sm:$0x1]
    %s931 = scalar_lea.vmem [#allocation3], 448
    %v932 = vld [vmem:[%s931] sm:$0xf]
    %v933 = vld [vmem:[%s931 + $0x4] sm:$0xf]
    %v934 = vld [vmem:[%s931 + $0x8] sm:$0xf]
    %v935 = vld [vmem:[%s931 + $0xc] sm:$0xf]
    %v936 = vld [vmem:[%s931 + $0x10] sm:$0xf]
    %v937 = vld [vmem:[%s931 + $0x14] sm:$0xf]
    %v938 = vld [vmem:[%s931 + $0x18] sm:$0xf]
    %v939 = vld [vmem:[%s931 + $0x1c] sm:$0xf]
    %v940 = vld [vmem:[%s931 + $0x20] sm:$0xf]
    %v941 = vld [vmem:[%s931 + $0x24] sm:$0xf]
    %v942 = vld [vmem:[%s931 + $0x28] sm:$0xf]
    %v943 = vld [vmem:[%s931 + $0x2c] sm:$0xf]
    %v944 = vld [vmem:[%s931 + $0x30] sm:$0xf]
    %v945 = vld [vmem:[%s931 + $0x34] sm:$0xf]
    %v946 = vld [vmem:[%s931 + $0x38] sm:$0xf]
    %v947 = vld [vmem:[%s931 + $0x3c] sm:$0xf]
    %v951 = vunpack.c.l.b16 %v928
    %v952 = vunpack.c.l.b16 %v929
    %v953 = vunpack.c.l.b16 %v930
    %v954 = vpack.c.b16 %v952, %v951
    %v955 = vpack.c.b16 %v953, %v953
    %v957 = vshrl.u32 %v954, 16
    %v959 = vshll.u32 %v954, 16
    %v961 = vrot.slane %v959, 1
    %v962 = vor.u32 %v957, %v961
    %v964 = vshll.u32 %v955, 16
    %v966 = vrot.slane %v964, 1
    %v967 = vsel %vm204, %v962, %v966
    %v985 = vunpack.c.l.b16 %v932
    %v986 = vunpack.c.l.b16 %v933
    %v987 = vunpack.c.l.b16 %v934
    %v988 = vunpack.c.l.b16 %v935
    %v989 = vunpack.c.l.b16 %v936
    %v990 = vunpack.c.l.b16 %v937
    %v991 = vunpack.c.l.b16 %v938
    %v992 = vunpack.c.l.b16 %v939
    %v993 = vunpack.c.l.b16 %v940
    %v994 = vunpack.c.l.b16 %v941
    %v995 = vunpack.c.l.b16 %v942
    %v996 = vunpack.c.l.b16 %v943
    %v997 = vunpack.c.l.b16 %v944
    %v998 = vunpack.c.l.b16 %v945
    %v999 = vunpack.c.l.b16 %v946
    %v1000 = vunpack.c.l.b16 %v947
    %v1001 = vpack.c.b16 %v986, %v985
    %v1002 = vpack.c.b16 %v988, %v987
    %v1003 = vpack.c.b16 %v990, %v989
    %v1004 = vpack.c.b16 %v992, %v991
    %v1005 = vpack.c.b16 %v994, %v993
    %v1006 = vpack.c.b16 %v996, %v995
    %v1007 = vpack.c.b16 %v998, %v997
    %v1008 = vpack.c.b16 %v1000, %v999
    %1017 = vmatprep.subr.bf16.mxu0 0
    %1018 = vmatpush1.bf16.msra.mxu0 %v1001
    %1019 = vmatprep.subr.bf16.mxu0 0
    %1020 = vmatpush1.bf16.msra.mxu0 %v1002
    %1021 = vmatprep.subr.bf16.mxu0 0
    %1022 = vmatpush1.bf16.msra.mxu0 %v1003
    %1023 = vmatprep.subr.bf16.mxu0 0
    %1024 = vmatpush1.bf16.msra.mxu0 %v1004
    %1025 = vmatprep.subr.bf16.mxu0 0
    %1026 = vmatpush1.bf16.msra.mxu0 %v1005
    %1027 = vmatprep.subr.bf16.mxu0 0
    %1028 = vmatpush1.bf16.msra.mxu0 %v1006
    %1029 = vmatprep.subr.bf16.mxu0 0
    %1030 = vmatpush1.bf16.msra.mxu0 %v1007
    %1031 = vmatprep.subr.bf16.mxu0 0
    %1032 = vmatpush1.bf16.msra.mxu0 %v1008
    %1033 = vmatprep.subr.bf16.mxu0 0
    %1034 = vmatpush1.bf16.msra.mxu0 0
    %1035 = vmatprep.subr.bf16.mxu0 0
    %1036 = vmatpush1.bf16.msra.mxu0 0
    %1037 = vmatprep.subr.bf16.mxu0 0
    %1038 = vmatpush1.bf16.msra.mxu0 0
    %1039 = vmatprep.subr.bf16.mxu0 0
    %1040 = vmatpush1.bf16.msra.mxu0 0
    %1041 = vmatprep.subr.bf16.mxu0 0
    %1042 = vmatpush1.bf16.msra.mxu0 0
    %1043 = vmatprep.subr.bf16.mxu0 0
    %1044 = vmatpush1.bf16.msra.mxu0 0
    %1045 = vmatprep.subr.bf16.mxu0 0
    %1046 = vmatpush1.bf16.msra.mxu0 0
    %1047 = vmatprep.subr.bf16.mxu0 0
    %1048 = vmatpush1.bf16.msra.mxu0 0
    %1049 = vmatprep.mubr.bf16.mxu0 0
    %1050 = vmatmul.mubr.bf16.gmra.mrb[0].mxu0 %v967
    %v1051 = vpop.f32.mrb[0].mxu0
    %v1052 = vadd.f32 0.0, %v1051
    %v1053 = vpop.f32.mrb[0].mxu0
    %v1054 = vpop.f32.mrb[0].mxu0
    %v1055 = vadd.f32 0.0, %v1054
    %v1056 = vpop.f32.mrb[0].mxu0
    %1057 = vdwg.mxu0
    %v1058 = vadd.f32 %v926, %v1052
    %v1059 = vadd.f32 %v927, %v1055
    %v1060 = vld [vmem:[%s0 + $0x4] sm:$0xe]
    %s1061 = scalar_lea.vmem [#allocation3], 512
    %v1062 = vld [vmem:[%s1061] sm:$0xf]
    %v1063 = vld [vmem:[%s1061 + $0x4] sm:$0xf]
    %v1064 = vld [vmem:[%s1061 + $0x8] sm:$0xf]
    %v1065 = vld [vmem:[%s1061 + $0xc] sm:$0xf]
    %v1066 = vld [vmem:[%s1061 + $0x10] sm:$0xf]
    %v1067 = vld [vmem:[%s1061 + $0x14] sm:$0xf]
    %v1068 = vld [vmem:[%s1061 + $0x18] sm:$0xf]
    %v1069 = vld [vmem:[%s1061 + $0x1c] sm:$0xf]
    %v1070 = vld [vmem:[%s1061 + $0x20] sm:$0xf]
    %v1071 = vld [vmem:[%s1061 + $0x24] sm:$0xf]
    %v1072 = vld [vmem:[%s1061 + $0x28] sm:$0xf]
    %v1073 = vld [vmem:[%s1061 + $0x2c] sm:$0xf]
    %v1074 = vld [vmem:[%s1061 + $0x30] sm:$0xf]
    %v1075 = vld [vmem:[%s1061 + $0x34] sm:$0xf]
    %v1076 = vld [vmem:[%s1061 + $0x38] sm:$0xf]
    %v1077 = vld [vmem:[%s1061 + $0x3c] sm:$0xf]
    %v1079 = vunpack.c.l.b16 %v1060
    %v1080 = vpack.c.b16 %v952, %v1079
    %v1081 = vrot.slane %v1080, 1
    %v1082 = vrot.slane %v955, 1
    %v1083 = vsel %vm330, %v1081, %v1082
    %v1101 = vunpack.c.l.b16 %v1062
    %v1102 = vunpack.c.l.b16 %v1063
    %v1103 = vunpack.c.l.b16 %v1064
    %v1104 = vunpack.c.l.b16 %v1065
    %v1105 = vunpack.c.l.b16 %v1066
    %v1106 = vunpack.c.l.b16 %v1067
    %v1107 = vunpack.c.l.b16 %v1068
    %v1108 = vunpack.c.l.b16 %v1069
    %v1109 = vunpack.c.l.b16 %v1070
    %v1110 = vunpack.c.l.b16 %v1071
    %v1111 = vunpack.c.l.b16 %v1072
    %v1112 = vunpack.c.l.b16 %v1073
    %v1113 = vunpack.c.l.b16 %v1074
    %v1114 = vunpack.c.l.b16 %v1075
    %v1115 = vunpack.c.l.b16 %v1076
    %v1116 = vunpack.c.l.b16 %v1077
    %v1117 = vpack.c.b16 %v1102, %v1101
    %v1118 = vpack.c.b16 %v1104, %v1103
    %v1119 = vpack.c.b16 %v1106, %v1105
    %v1120 = vpack.c.b16 %v1108, %v1107
    %v1121 = vpack.c.b16 %v1110, %v1109
    %v1122 = vpack.c.b16 %v1112, %v1111
    %v1123 = vpack.c.b16 %v1114, %v1113
    %v1124 = vpack.c.b16 %v1116, %v1115
    %1133 = vmatprep.subr.bf16.mxu0 0
    %1134 = vmatpush1.bf16.msra.mxu0 %v1117
    %1135 = vmatprep.subr.bf16.mxu0 0
    %1136 = vmatpush1.bf16.msra.mxu0 %v1118
    %1137 = vmatprep.subr.bf16.mxu0 0
    %1138 = vmatpush1.bf16.msra.mxu0 %v1119
    %1139 = vmatprep.subr.bf16.mxu0 0
    %1140 = vmatpush1.bf16.msra.mxu0 %v1120
    %1141 = vmatprep.subr.bf16.mxu0 0
    %1142 = vmatpush1.bf16.msra.mxu0 %v1121
    %1143 = vmatprep.subr.bf16.mxu0 0
    %1144 = vmatpush1.bf16.msra.mxu0 %v1122
    %1145 = vmatprep.subr.bf16.mxu0 0
    %1146 = vmatpush1.bf16.msra.mxu0 %v1123
    %1147 = vmatprep.subr.bf16.mxu0 0
    %1148 = vmatpush1.bf16.msra.mxu0 %v1124
    %1149 = vmatprep.subr.bf16.mxu0 0
    %1150 = vmatpush1.bf16.msra.mxu0 0
    %1151 = vmatprep.subr.bf16.mxu0 0
    %1152 = vmatpush1.bf16.msra.mxu0 0
    %1153 = vmatprep.subr.bf16.mxu0 0
    %1154 = vmatpush1.bf16.msra.mxu0 0
    %1155 = vmatprep.subr.bf16.mxu0 0
    %1156 = vmatpush1.bf16.msra.mxu0 0
    %1157 = vmatprep.subr.bf16.mxu0 0
    %1158 = vmatpush1.bf16.msra.mxu0 0
    %1159 = vmatprep.subr.bf16.mxu0 0
    %1160 = vmatpush1.bf16.msra.mxu0 0
    %1161 = vmatprep.subr.bf16.mxu0 0
    %1162 = vmatpush1.bf16.msra.mxu0 0
    %1163 = vmatprep.subr.bf16.mxu0 0
    %1164 = vmatpush1.bf16.msra.mxu0 0
    %1165 = vmatprep.mubr.bf16.mxu0 0
    %1166 = vmatmul.mubr.bf16.gmra.mrb[0].mxu0 %v1083
    %v1167 = vpop.f32.mrb[0].mxu0
    %v1168 = vadd.f32 0.0, %v1167
    %v1169 = vpop.f32.mrb[0].mxu0
    %v1170 = vpop.f32.mrb[0].mxu0
    %v1171 = vadd.f32 0.0, %v1170
    %v1172 = vpop.f32.mrb[0].mxu0
    %1173 = vdwg.mxu0
    %v1174 = vmul.f32 %v1168, %v429
    %v1175 = vmul.f32 %v1171, %v434
    %v1176 = vadd.f32 %v1058, %v1174
    %v1177 = vadd.f32 %v1059, %v1175
    %1178 = vst [vmem:[#allocation2] sm:$0xff] %v1176
    %1179 = vst [vmem:[#allocation2 + $0x8] sm:$0xff] %v1177
    // Predicated region
    $region34: #{tpu_custom_call.1} parent=1 // pred_check
      %p1180 = pneg %p39
    $region35: #{tpu_custom_call.1} parent=1 // pred_check_branch
      %1182 = sbr.rel (%p1180) target = $region37
    $region36: #{tpu_custom_call.1} parent=1 // pred_region
      %v1183 = vld [vmem:[#allocation2] sm:$0xff]
      %v1184 = vld [vmem:[#allocation2 + $0x8] sm:$0xff]
      %v1185 = vld [vmem:[%s4] sm:$0x1]
      %v1187 = vlaneseq
      %v1188 = vshrl.u32 %v1187, 7
      %v1189 = vsub.s32 0, %v1188
      %v1190 = vrot.slane %v1185, %v1189
      %v1192 = vmul.f32 %v1183, %v1190
      %v1193 = vmul.f32 %v1184, %v1190
      %v1194 = vld [vmem:[%s5] sm:$0x1]
      %v1196 = vlaneseq
      %v1197 = vshrl.u32 %v1196, 7
      %v1198 = vsub.s32 0, %v1197
      %v1199 = vrot.slane %v1194, %v1198
      %v1201 = vadd.f32 %v1192, %v1199
      %v1202 = vadd.f32 %v1193, %v1199
      %1203 = vst [vmem:[#allocation6] sm:$0xff] %v1201
      %1204 = vst [vmem:[#allocation6 + $0x8] sm:$0xff] %v1202
    $region37: #{tpu_custom_call.1} parent=1 // pred_fallthru
      _
    // Predicated region
    $region38: #{tpu_custom_call.1} parent=1 // pred_check
      _
    $region39: #{tpu_custom_call.1} parent=1 // pred_check_branch
      %1206 = sbr.rel (0) target = $region41
    $region40: #{tpu_custom_call.1} parent=1 // pred_region
      %s1208 = ssub.s32 256, 256
      %1209 = vsyncadd [#allocation5], %s1208
      %s1210 = sshll.u32 [#allocation6], 4
      %s1211 = int_to_ptr.vmem [resolvable:$true] %s1210
      %1216 = dma.vmem_to_hbm [thread:$0]  %s1211, 256, %s6, [#allocation5], 128, 128, 8
    $region41: #{tpu_custom_call.1} parent=1 // pred_fallthru
      _
    // Predicated region
    $region42: #{tpu_custom_call.1} parent=1 // pred_check
      _
    $region43: #{tpu_custom_call.1} parent=1 // pred_check_branch
      %1218 = sbr.rel (0) target = $region45
    $region44: #{tpu_custom_call.1} parent=1 // pred_region
      %1219 = dma.done [#allocation5], 256
    $region45: #{tpu_custom_call.1} parent=1 // pred_fallthru
      _
    %1220 = vsyncpa [#allocation4], 1
    %1221 = vsyncpa [#allocation5], 1

</llo_original>
